<compile_context>
chip_gen: v7x
topology: tpu7x:2x2x1
jax: 0.10.0
libtpu: 0.0.40
codegen_flags: <defaults>
</compile_context>

<pallas_src>
import jax
import jax.numpy as jnp
import numpy as np
from jax import lax
from jax.experimental import pallas as pl
from jax.experimental.pallas import tpu as pltpu

# ---------------------------------------------------------------------------
# Hyperparameters (small, module-consistent; L must be divisible by 32)
# ---------------------------------------------------------------------------
SAMPLING_RATE = 16            # -> temporal kernels K1 = 8, K2 = 2
N_CLASSES = 3                 # N
L = 64                        # signal length
C = 4                         # EEG channels
F1 = 8                        # temporal filters
D = 2                         # depth multiplier
F2 = 16                       # pointwise filters
DF1 = D * F1

K1 = SAMPLING_RATE // 2
K2 = SAMPLING_RATE // 8
P1L = (K1 - 1) // 2           # PyTorch padding='same': left = (k-1)//2
P1R = (K1 - 1) - P1L
P2L = (K2 - 1) // 2
P2R = (K2 - 1) - P2L
POOL1 = 4                     # AvgPool2d(1, 4): kernel 1, stride 4 -> column subsample
POOL2 = 8                     # AvgPool2d(1, 8)
LP1 = L // POOL1              # length after first pool
LP2 = LP1 // POOL2            # length after second pool (== L // 32)
BN_EPS = 1e-5

PC = POOL1 * C                            # phase-split input rows (16)
DMIN1 = (0 - P1L) // POOL1                # most negative pooled-time shift needed by conv1
DMAX1 = (K1 - 1 - P1L) // POOL1
ND1 = DMAX1 - DMIN1 + 1                   # number of pooled-time shifts for conv1 (3)

MAX_TB = 64                   # batch examples per grid step cap (=> up to 1024 lanes/step)

assert L % 32 == 0 and LP1 % POOL2 == 0


def _elu(x):
    # clamp the exp argument so no inf intermediate is produced on the discarded branch
    return jnp.where(x > 0, x, jnp.exp(jnp.minimum(x, 0.0)) - 1.0)


# ---------------------------------------------------------------------------
# Pallas kernel factory: whole EEGNet forward for `tb` batch elements per step
# Lane index of every activation tile is  b_local*LP1 + q  (q = pooled time).
# ---------------------------------------------------------------------------
def _make_kernel(tb: int):
    tbl1 = tb * LP1

    def _shift_pooled(arr, d, q_lane):
        """arr[:, l] -> arr[:, l + d] within each example's LP1-lane segment, zero-padded."""
        if d == 0:
            return arr
        # pltpu.roll follows jnp.roll semantics: result[l] = arr[(l - shift) mod n].
        shifted = pltpu.roll(arr, (-d) % tbl1, 1)
        valid = ((q_lane + d >= 0) & (q_lane + d < LP1)).astype(arr.dtype)
        return shifted * valid

    def kernel(xq_ref, wf1_ref, b1_ref, wf2_ref, b2_ref, wcat_ref, bclf_ref,
               gsum_ref, out_ref, x1s_ref, x2s_ref, xcs_ref):
        q_lane = lax.broadcasted_iota(jnp.int32, (1, tbl1), 1) % LP1

        # ---- block1: conv1 + bn1 + depthwise conv + bn2 fused into one matmul ------
        # im2col at the pooled (stride-4) positions: ND1 whole-tile pooled-time shifts
        # of the phase-split input xq[r*C + c, b*LP1 + q] = x[b, c, POOL1*q + r].
        xq = xq_ref[...]                                             # (PC, tbl1)
        for di in range(ND1):
            d = DMIN1 + di
            x1s_ref[di * PC:(di + 1) * PC, :] = _shift_pooled(xq, d, q_lane)
        p1 = _elu(jnp.dot(wf1_ref[...], x1s_ref[...],
                          preferred_element_type=jnp.float32) + b1_ref[...])   # (DF1, tbl1)

        # ---- block2: depthwise temporal conv + 1x1 pointwise conv + bn fused -------
        for j2 in range(K2):
            x2s_ref[j2 * DF1:(j2 + 1) * DF1, :] = _shift_pooled(p1, j2 - P2L, q_lane)
        out3 = _elu(jnp.dot(wf2_ref[...], x2s_ref[...],
                            preferred_element_type=jnp.float32) + b2_ref[...])  # (F2, tbl1)

        # ---- AvgPool2d(1,8) + Flatten + Linear --------------------------------------
        # Column pick q in {0, 8, ...} folded into lane masks; the per-example sum is a
        # (tbl1, tb) 0/1 group-sum matmul (no strided gathers / cross-lane reductions).
        for t2 in range(LP2):
            xcs_ref[t2 * F2:(t2 + 1) * F2, :] = (
                out3 * (q_lane == POOL2 * t2).astype(jnp.float32))
        mlog = jnp.dot(wcat_ref[...], xcs_ref[...],
                       preferred_element_type=jnp.float32)          # (N, tbl1)
        logits = jnp.dot(mlog, gsum_ref[...],
                         preferred_element_type=jnp.float32) + bclf_ref[...]   # (N, tb)
        out_ref[...] = logits.reshape(1, N_CLASSES, tb)

    return kernel


# ---------------------------------------------------------------------------
# Parameter init (deterministic, synthetic) and fused-operand preparation
# ---------------------------------------------------------------------------
def init_params(key):
    ks = jax.random.split(key, 9)
    p = {}
    p["conv1_w"] = jax.random.normal(ks[0], (F1, 1, 1, K1), jnp.float32) * 0.2
    p["dconv_w"] = jax.random.normal(ks[1], (DF1, 1, C, 1), jnp.float32) * 0.3
    p["sconvd_w"] = jax.random.normal(ks[2], (DF1, 1, 1, K2), jnp.float32) * 0.3
    p["sconvp_w"] = jax.random.normal(ks[3], (F2, DF1, 1, 1), jnp.float32) * 0.2
    p["clf_w"] = jax.random.normal(ks[4], (N_CLASSES, F2 * L // 32), jnp.float32) * 0.1
    p["clf_b"] = jax.random.normal(ks[5], (N_CLASSES,), jnp.float32) * 0.1
    for i, (name, nch) in enumerate([("bn1", F1), ("bn2", DF1), ("bn3", F2)]):
        kk = jax.random.split(ks[6 + i], 4)
        p[name + "_w"] = jax.random.uniform(kk[0], (nch,), jnp.float32, 0.5, 1.5)
        p[name + "_b"] = jax.random.normal(kk[1], (nch,), jnp.float32) * 0.1
        p[name + "_mean"] = jax.random.normal(kk[2], (nch,), jnp.float32) * 0.1
        p[name + "_var"] = jax.random.uniform(kk[3], (nch,), jnp.float32, 0.5, 1.5)
    return p


def _fold_bn(w, b, mean, var):
    scale = w / jnp.sqrt(var + BN_EPS)
    shift = b - mean * scale
    return scale, shift


def prepare_operands(p):
    sc1, sh1 = _fold_bn(p["bn1_w"], p["bn1_b"], p["bn1_mean"], p["bn1_var"])
    sc2, sh2 = _fold_bn(p["bn2_w"], p["bn2_b"], p["bn2_mean"], p["bn2_var"])
    sc3, sh3 = _fold_bn(p["bn3_w"], p["bn3_b"], p["bn3_mean"], p["bn3_var"])

    w1 = p["conv1_w"][:, 0, 0, :]                                  # (F1, K1)
    wd = p["dconv_w"][:, 0, :, 0]                                  # (DF1, C)
    grp = jnp.arange(DF1) // D                                     # output-channel group

    # Fused block1 weight:  A[o, j, c] = bn2_s[o]*bn1_s[g]*w1[g,j]*wd[o,c], g = o//D.
    a = np.asarray((sc2 * sc1[grp])[:, None, None] * w1[grp][:, :, None] * wd[:, None, :])
    # Re-group the K1 temporal taps by pooled-time shift d and pool phase r (j = 4d+r+P1L)
    # so the kernel-side im2col is ND1 whole-tile shifts of the phase-split input.
    wf1x = np.zeros((DF1, ND1, POOL1, C), np.float32)
    for di in range(ND1):
        for r in range(POOL1):
            j = POOL1 * (DMIN1 + di) + r + P1L
            if 0 <= j < K1:
                wf1x[:, di, r, :] = a[:, j, :]
    wf1 = jnp.asarray(wf1x.reshape(DF1, ND1 * PC))                 # (DF1, ND1*POOL1*C)
    b1 = (sc2 * sh1[grp] * jnp.sum(wd, axis=1) + sh2)[:, None]     # (DF1, 1)

    wd2 = p["sconvd_w"][:, 0, 0, :]                                # (DF1, K2)
    wp = p["sconvp_w"][:, :, 0, 0]                                 # (F2, DF1)
    # Fused block2 weight:  Wf2[f, j2*DF1 + o] = bn3_s[f]*wp[f,o]*wd2[o,j2]
    bw = sc3[:, None, None] * wd2.T[None, :, :] * wp[:, None, :]   # (F2, K2, DF1)
    wf2 = bw.reshape(F2, K2 * DF1)
    b2 = sh3[:, None]                                              # (F2, 1)

    # Classifier rearranged to match xcs row order (t2-major, f2-minor).
    wc3 = p["clf_w"].reshape(N_CLASSES, F2, LP2)
    wcat = jnp.concatenate([wc3[:, :, t] for t in range(LP2)], axis=1)  # (N, LP2*F2)
    bclf = p["clf_b"][:, None]                                     # (N, 1)
    return wf1, b1, wf2, b2, wcat, bclf


# ---------------------------------------------------------------------------
# Wrapper
# ---------------------------------------------------------------------------
def _round_up(a, m):
    return -(-a // m) * m


def _pick_tb(batch):
    """Largest batch tile (multiple of 8, <= MAX_TB) that still leaves >=2 grid steps
    when possible, so v7x's two TensorCores both get work (harmless on v5e/v6e)."""
    bp = _round_up(max(batch, 1), 8)
    return min(MAX_TB, max(8, _round_up(-(-bp // 2), 8)))


@jax.jit
def eegnet_forward(x, operands):
    wf1, b1, wf2, b2, wcat, bclf = operands
    B = x.shape[0]
    tb = _pick_tb(B)
    nb = -(-B // tb)
    Bp = nb * tb
    tbl1 = tb * LP1
    if Bp != B:
        x = jnp.pad(x, ((0, Bp - B), (0, 0), (0, 0)))

    # Phase-split layout plumbing (pure data movement, one fused XLA copy):
    #   xq[r*C + c, b*LP1 + q] = x[b, c, POOL1*q + r]
    xq = (jnp.transpose(x, (1, 0, 2))
          .reshape(C, Bp, LP1, POOL1)
          .transpose(3, 0, 1, 2)
          .reshape(PC, Bp * LP1))

    # 0/1 per-example lane group-sum matrix (trace-time constant, <=256 KiB at tb=64;
    # its block index never changes so it is DMA'd once per core).
    gsum = jnp.asarray(
        (np.arange(tbl1)[:, None] // LP1 == np.arange(tb)[None, :]).astype(np.float32))

    out = pl.pallas_call(
        _make_kernel(tb),
        out_shape=jax.ShapeDtypeStruct((nb, N_CLASSES, tb), jnp.float32),
        grid=(nb,),
        in_specs=[
            pl.BlockSpec((PC, tbl1), lambda i: (0, i)),            # phase-split input
            pl.BlockSpec(wf1.shape, lambda i: (0, 0)),             # fused block1 weight
            pl.BlockSpec(b1.shape, lambda i: (0, 0)),
            pl.BlockSpec(wf2.shape, lambda i: (0, 0)),             # fused block2 weight
            pl.BlockSpec(b2.shape, lambda i: (0, 0)),
            pl.BlockSpec(wcat.shape, lambda i: (0, 0)),            # classifier weight
            pl.BlockSpec(bclf.shape, lambda i: (0, 0)),
            pl.BlockSpec((tbl1, tb), lambda i: (0, 0)),            # group-sum matrix
        ],
        out_specs=pl.BlockSpec((1, N_CLASSES, tb), lambda i: (i, 0, 0)),
        scratch_shapes=[
            pltpu.VMEM((ND1 * PC, tbl1), jnp.float32),             # block1 im2col
            pltpu.VMEM((K2 * DF1, tbl1), jnp.float32),             # block2 im2col
            pltpu.VMEM((LP2 * F2, tbl1), jnp.float32),             # pooled/masked features
        ],
        compiler_params=pltpu.CompilerParams(dimension_semantics=("parallel",)),
    )(xq, wf1, b1, wf2, b2, wcat, bclf, gsum)

    logits = jnp.transpose(out, (0, 2, 1)).reshape(Bp, N_CLASSES)
    return logits[:B]


# ---------------------------------------------------------------------------
# Pure-JAX reference (same eval-mode semantics) for a correctness check
# ---------------------------------------------------------------------------
def eegnet_reference(x, p):
    dn = ("NCHW", "OIHW", "NCHW")
    hp = lax.Precision.HIGHEST
    sc1, sh1 = _fold_bn(p["bn1_w"], p["bn1_b"], p["bn1_mean"], p["bn1_var"])
    sc2, sh2 = _fold_bn(p["bn2_w"], p["bn2_b"], p["bn2_mean"], p["bn2_var"])
    sc3, sh3 = _fold_bn(p["bn3_w"], p["bn3_b"], p["bn3_mean"], p["bn3_var"])

    h = x[:, None, :, :]
    h = lax.conv_general_dilated(h, p["conv1_w"], (1, 1), [(0, 0), (P1L, P1R)],
                                 dimension_numbers=dn, precision=hp)
    h = h * sc1[None, :, None, None] + sh1[None, :, None, None]
    h = lax.conv_general_dilated(h, p["dconv_w"], (1, 1), "VALID",
                                 dimension_numbers=dn, feature_group_count=F1, precision=hp)
    h = h * sc2[None, :, None, None] + sh2[None, :, None, None]
    h = jnp.where(h > 0, h, jnp.exp(jnp.minimum(h, 0.0)) - 1.0)
    h = h[:, :, :, ::POOL1]
    h = lax.conv_general_dilated(h, p["sconvd_w"], (1, 1), [(0, 0), (P2L, P2R)],
                                 dimension_numbers=dn, feature_group_count=DF1, precision=hp)
    h = lax.conv_general_dilated(h, p["sconvp_w"], (1, 1), "VALID",
                                 dimension_numbers=dn, precision=hp)
    h = h * sc3[None, :, None, None] + sh3[None, :, None, None]
    h = jnp.where(h > 0, h, jnp.exp(jnp.minimum(h, 0.0)) - 1.0)
    h = h[:, :, :, ::POOL2]
    feat = h.reshape(h.shape[0], -1)
    return jnp.dot(feat, p["clf_w"].T, precision=hp) + p["clf_b"]


if __name__ == "__main__":
    key = jax.random.PRNGKey(0)
    k_x, k_p = jax.random.split(key)
    B = 50                                                          # exercises batch padding
    x = jax.random.normal(k_x, (B, C, L), jnp.float32)              # (B, C, L)
    params = init_params(k_p)
    operands = prepare_operands(params)

    logits = jax.block_until_ready(eegnet_forward(x, operands))
    assert logits.shape == (B, N_CLASSES)

    ref = jax.block_until_ready(eegnet_reference(x, params))
    # Kernel matmuls use default MXU precision (bf16 operand passes, f32 accumulation);
    # reference uses HIGHEST, so compare with a correspondingly relaxed tolerance.
    np.testing.assert_allclose(np.asarray(logits), np.asarray(ref), rtol=2e-2, atol=2e-2)

    print("KERNEL_OK")
</pallas_src>

<mosaic_0001>
module attributes {stable_mosaic.version = 11 : i64} {
  func.func @kernel(%arg0: i32, %arg1: memref<16x512xf32, #tpu.memory_space<vmem>>, %arg2: memref<16x48xf32, #tpu.memory_space<vmem>>, %arg3: memref<16x1xf32, #tpu.memory_space<vmem>>, %arg4: memref<16x32xf32, #tpu.memory_space<vmem>>, %arg5: memref<16x1xf32, #tpu.memory_space<vmem>>, %arg6: memref<3x32xf32, #tpu.memory_space<vmem>>, %arg7: memref<3x1xf32, #tpu.memory_space<vmem>>, %arg8: memref<512x32xf32, #tpu.memory_space<vmem>>, %arg9: memref<1x3x32xf32, #tpu.memory_space<vmem>>, %arg10: memref<48x512xf32, #tpu.memory_space<vmem>>, %arg11: memref<32x512xf32, #tpu.memory_space<vmem>>, %arg12: memref<32x512xf32, #tpu.memory_space<vmem>>) attributes {dimension_semantics = [#tpu.dimension_semantics<parallel>], iteration_bounds = array<i64: 2>, scalar_prefetch = 0 : i64, scratch_operands = 3 : i64, tpu.core_type = #tpu.core_type<tc>, window_params = [{transform_indices = @transform_0, window_bounds = array<i64: 16, 512>}, {pipeline_mode = #tpu.pipeline_mode<synchronous>, transform_indices = @transform_1, window_bounds = array<i64: 16, 48>}, {pipeline_mode = #tpu.pipeline_mode<synchronous>, transform_indices = @transform_2, window_bounds = array<i64: 16, 1>}, {pipeline_mode = #tpu.pipeline_mode<synchronous>, transform_indices = @transform_3, window_bounds = array<i64: 16, 32>}, {pipeline_mode = #tpu.pipeline_mode<synchronous>, transform_indices = @transform_4, window_bounds = array<i64: 16, 1>}, {pipeline_mode = #tpu.pipeline_mode<synchronous>, transform_indices = @transform_5, window_bounds = array<i64: 3, 32>}, {pipeline_mode = #tpu.pipeline_mode<synchronous>, transform_indices = @transform_6, window_bounds = array<i64: 3, 1>}, {pipeline_mode = #tpu.pipeline_mode<synchronous>, transform_indices = @transform_7, window_bounds = array<i64: 512, 32>}, {transform_indices = @transform_8, window_bounds = array<i64: 1, 3, 32>}]} {
    %0 = tpu.iota {dimensions = array<i32: 1>} : vector<1x512xi32>
    %c16_i32 = arith.constant 16 : i32
    %c0_i32 = arith.constant 0 : i32
    %1 = arith.cmpi eq, %c16_i32, %c0_i32 : i32
    %c1_i32 = arith.constant 1 : i32
    %2 = arith.select %1, %c1_i32, %c16_i32 : i32
    %3 = vector.broadcast %2 : i32 to vector<1x512xi32>
    %4 = arith.remsi %0, %3 : vector<1x512xi32>
    %c0_i32_0 = arith.constant 0 : i32
    %5 = vector.broadcast %c0_i32_0 : i32 to vector<1x512xi32>
    %6 = arith.cmpi ne, %4, %5 : vector<1x512xi32>
    %c0_i32_1 = arith.constant 0 : i32
    %7 = vector.broadcast %c0_i32_1 : i32 to vector<1x512xi32>
    %8 = arith.cmpi slt, %4, %7 : vector<1x512xi32>
    %c0_i32_2 = arith.constant 0 : i32
    %9 = arith.cmpi slt, %2, %c0_i32_2 : i32
    %10 = vector.broadcast %9 : i1 to vector<1x512xi1>
    %11 = vector.broadcast %10 : vector<1x512xi1> to vector<1x512xi1>
    %12 = arith.xori %8, %11 : vector<1x512xi1>
    %13 = arith.andi %12, %6 : vector<1x512xi1>
    %14 = vector.broadcast %2 : i32 to vector<1x512xi32>
    %15 = arith.addi %4, %14 : vector<1x512xi32>
    %16 = arith.select %13, %15, %4 : vector<1x512xi1>, vector<1x512xi32>
    %c0 = arith.constant 0 : index
    %c0_3 = arith.constant 0 : index
    %17 = vector.load %arg1[%c0, %c0_3] : memref<16x512xf32, #tpu.memory_space<vmem>>, vector<16x512xf32>
    %c1_i32_4 = arith.constant 1 : i32
    %18 = tpu.dynamic_rotate %17 by %c1_i32_4 dim 1 : vector<16x512xf32>, i32 -> vector<16x512xf32>
    %c-1_i32 = arith.constant -1 : i32
    %19 = vector.broadcast %c-1_i32 : i32 to vector<1x512xi32>
    %20 = arith.addi %16, %19 : vector<1x512xi32>
    %c0_i32_5 = arith.constant 0 : i32
    %21 = vector.broadcast %c0_i32_5 : i32 to vector<1x512xi32>
    %22 = arith.cmpi sge, %20, %21 : vector<1x512xi32>
    %c-1_i32_6 = arith.constant -1 : i32
    %23 = vector.broadcast %c-1_i32_6 : i32 to vector<1x512xi32>
    %24 = arith.addi %16, %23 : vector<1x512xi32>
    %c16_i32_7 = arith.constant 16 : i32
    %25 = vector.broadcast %c16_i32_7 : i32 to vector<1x512xi32>
    %26 = arith.cmpi slt, %24, %25 : vector<1x512xi32>
    %27 = arith.andi %22, %26 : vector<1x512xi1>
    %28 = arith.extui %27 : vector<1x512xi1> to vector<1x512xi32>
    %29 = arith.sitofp %28 : vector<1x512xi32> to vector<1x512xf32>
    %30 = vector.broadcast %29 : vector<1x512xf32> to vector<16x512xf32>
    %31 = arith.mulf %18, %30 : vector<16x512xf32>
    %c0_8 = arith.constant 0 : index
    %c0_9 = arith.constant 0 : index
    %32 = vector.load %arg10[%c0_8, %c0_9] : memref<48x512xf32, #tpu.memory_space<vmem>>, vector<16x512xf32>
    tpu.vector_store %arg10[%c0_8, %c0_9], %31 {strides = array<i32>} : memref<48x512xf32, #tpu.memory_space<vmem>>, vector<16x512xf32>,
    %c16 = arith.constant 16 : index
    %c0_10 = arith.constant 0 : index
    %33 = vector.load %arg10[%c16, %c0_10] : memref<48x512xf32, #tpu.memory_space<vmem>>, vector<16x512xf32>
    tpu.vector_store %arg10[%c16, %c0_10], %17 {strides = array<i32>} : memref<48x512xf32, #tpu.memory_space<vmem>>, vector<16x512xf32>,
    %c511_i32 = arith.constant 511 : i32
    %34 = tpu.dynamic_rotate %17 by %c511_i32 dim 1 : vector<16x512xf32>, i32 -> vector<16x512xf32>
    %c1_i32_11 = arith.constant 1 : i32
    %35 = vector.broadcast %c1_i32_11 : i32 to vector<1x512xi32>
    %36 = arith.addi %16, %35 : vector<1x512xi32>
    %c0_i32_12 = arith.constant 0 : i32
    %37 = vector.broadcast %c0_i32_12 : i32 to vector<1x512xi32>
    %38 = arith.cmpi sge, %36, %37 : vector<1x512xi32>
    %c1_i32_13 = arith.constant 1 : i32
    %39 = vector.broadcast %c1_i32_13 : i32 to vector<1x512xi32>
    %40 = arith.addi %16, %39 : vector<1x512xi32>
    %c16_i32_14 = arith.constant 16 : i32
    %41 = vector.broadcast %c16_i32_14 : i32 to vector<1x512xi32>
    %42 = arith.cmpi slt, %40, %41 : vector<1x512xi32>
    %43 = arith.andi %38, %42 : vector<1x512xi1>
    %44 = arith.extui %43 : vector<1x512xi1> to vector<1x512xi32>
    %45 = arith.sitofp %44 : vector<1x512xi32> to vector<1x512xf32>
    %46 = vector.broadcast %45 : vector<1x512xf32> to vector<16x512xf32>
    %47 = arith.mulf %34, %46 : vector<16x512xf32>
    %c32 = arith.constant 32 : index
    %c0_15 = arith.constant 0 : index
    %48 = vector.load %arg10[%c32, %c0_15] : memref<48x512xf32, #tpu.memory_space<vmem>>, vector<16x512xf32>
    tpu.vector_store %arg10[%c32, %c0_15], %47 {strides = array<i32>} : memref<48x512xf32, #tpu.memory_space<vmem>>, vector<16x512xf32>,
    %c0_16 = arith.constant 0 : index
    %c0_17 = arith.constant 0 : index
    %49 = vector.load %arg2[%c0_16, %c0_17] : memref<16x48xf32, #tpu.memory_space<vmem>>, vector<16x48xf32>
    %c0_18 = arith.constant 0 : index
    %c0_19 = arith.constant 0 : index
    %50 = vector.load %arg10[%c0_18, %c0_19] : memref<48x512xf32, #tpu.memory_space<vmem>>, vector<48x512xf32>
    %cst = arith.constant dense<0.000000e+00> : vector<16x512xf32>
    %51 = tpu.matmul %49, %50, %cst {dimension_numbers = #tpu.dot_dimension_numbers<[1], [0], [0], [1], [0, 0, 1, 1], [], []>} : vector<16x48xf32>, vector<48x512xf32>, vector<16x512xf32> -> vector<16x512xf32>
    %c0_20 = arith.constant 0 : index
    %c0_21 = arith.constant 0 : index
    %52 = vector.load %arg3[%c0_20, %c0_21] : memref<16x1xf32, #tpu.memory_space<vmem>>, vector<16x1xf32>
    %53 = vector.broadcast %52 : vector<16x1xf32> to vector<16x512xf32>
    %54 = arith.addf %51, %53 : vector<16x512xf32>
    %cst_22 = arith.constant 0.000000e+00 : f32
    %55 = vector.broadcast %cst_22 : f32 to vector<16x512xf32>
    %56 = arith.cmpf ogt, %54, %55 : vector<16x512xf32>
    %cst_23 = arith.constant 0.000000e+00 : f32
    %57 = vector.broadcast %cst_23 : f32 to vector<16x512xf32>
    %58 = arith.minimumf %54, %57 : vector<16x512xf32>
    %59 = math.exp %58 : vector<16x512xf32>
    %cst_24 = arith.constant 1.000000e+00 : f32
    %60 = vector.broadcast %cst_24 : f32 to vector<16x512xf32>
    %61 = arith.subf %59, %60 : vector<16x512xf32>
    %62 = arith.select %56, %54, %61 : vector<16x512xi1>, vector<16x512xf32>
    %c0_25 = arith.constant 0 : index
    %c0_26 = arith.constant 0 : index
    %63 = vector.load %arg11[%c0_25, %c0_26] : memref<32x512xf32, #tpu.memory_space<vmem>>, vector<16x512xf32>
    tpu.vector_store %arg11[%c0_25, %c0_26], %62 {strides = array<i32>} : memref<32x512xf32, #tpu.memory_space<vmem>>, vector<16x512xf32>,
    %c511_i32_27 = arith.constant 511 : i32
    %64 = tpu.dynamic_rotate %62 by %c511_i32_27 dim 1 : vector<16x512xf32>, i32 -> vector<16x512xf32>
    %c1_i32_28 = arith.constant 1 : i32
    %65 = vector.broadcast %c1_i32_28 : i32 to vector<1x512xi32>
    %66 = arith.addi %16, %65 : vector<1x512xi32>
    %c0_i32_29 = arith.constant 0 : i32
    %67 = vector.broadcast %c0_i32_29 : i32 to vector<1x512xi32>
    %68 = arith.cmpi sge, %66, %67 : vector<1x512xi32>
    %c1_i32_30 = arith.constant 1 : i32
    %69 = vector.broadcast %c1_i32_30 : i32 to vector<1x512xi32>
    %70 = arith.addi %16, %69 : vector<1x512xi32>
    %c16_i32_31 = arith.constant 16 : i32
    %71 = vector.broadcast %c16_i32_31 : i32 to vector<1x512xi32>
    %72 = arith.cmpi slt, %70, %71 : vector<1x512xi32>
    %73 = arith.andi %68, %72 : vector<1x512xi1>
    %74 = arith.extui %73 : vector<1x512xi1> to vector<1x512xi32>
    %75 = arith.sitofp %74 : vector<1x512xi32> to vector<1x512xf32>
    %76 = vector.broadcast %75 : vector<1x512xf32> to vector<16x512xf32>
    %77 = arith.mulf %64, %76 : vector<16x512xf32>
    %c16_32 = arith.constant 16 : index
    %c0_33 = arith.constant 0 : index
    %78 = vector.load %arg11[%c16_32, %c0_33] : memref<32x512xf32, #tpu.memory_space<vmem>>, vector<16x512xf32>
    tpu.vector_store %arg11[%c16_32, %c0_33], %77 {strides = array<i32>} : memref<32x512xf32, #tpu.memory_space<vmem>>, vector<16x512xf32>,
    %c0_34 = arith.constant 0 : index
    %c0_35 = arith.constant 0 : index
    %79 = vector.load %arg4[%c0_34, %c0_35] : memref<16x32xf32, #tpu.memory_space<vmem>>, vector<16x32xf32>
    %c0_36 = arith.constant 0 : index
    %c0_37 = arith.constant 0 : index
    %80 = vector.load %arg11[%c0_36, %c0_37] : memref<32x512xf32, #tpu.memory_space<vmem>>, vector<32x512xf32>
    %cst_38 = arith.constant dense<0.000000e+00> : vector<16x512xf32>
    %81 = tpu.matmul %79, %80, %cst_38 {dimension_numbers = #tpu.dot_dimension_numbers<[1], [0], [0], [1], [0, 0, 1, 1], [], []>} : vector<16x32xf32>, vector<32x512xf32>, vector<16x512xf32> -> vector<16x512xf32>
    %c0_39 = arith.constant 0 : index
    %c0_40 = arith.constant 0 : index
    %82 = vector.load %arg5[%c0_39, %c0_40] : memref<16x1xf32, #tpu.memory_space<vmem>>, vector<16x1xf32>
    %83 = vector.broadcast %82 : vector<16x1xf32> to vector<16x512xf32>
    %84 = arith.addf %81, %83 : vector<16x512xf32>
    %cst_41 = arith.constant 0.000000e+00 : f32
    %85 = vector.broadcast %cst_41 : f32 to vector<16x512xf32>
    %86 = arith.cmpf ogt, %84, %85 : vector<16x512xf32>
    %cst_42 = arith.constant 0.000000e+00 : f32
    %87 = vector.broadcast %cst_42 : f32 to vector<16x512xf32>
    %88 = arith.minimumf %84, %87 : vector<16x512xf32>
    %89 = math.exp %88 : vector<16x512xf32>
    %cst_43 = arith.constant 1.000000e+00 : f32
    %90 = vector.broadcast %cst_43 : f32 to vector<16x512xf32>
    %91 = arith.subf %89, %90 : vector<16x512xf32>
    %92 = arith.select %86, %84, %91 : vector<16x512xi1>, vector<16x512xf32>
    %c0_i32_44 = arith.constant 0 : i32
    %93 = vector.broadcast %c0_i32_44 : i32 to vector<1x512xi32>
    %94 = arith.cmpi eq, %16, %93 : vector<1x512xi32>
    %95 = arith.extui %94 : vector<1x512xi1> to vector<1x512xi32>
    %96 = arith.sitofp %95 : vector<1x512xi32> to vector<1x512xf32>
    %97 = vector.broadcast %96 : vector<1x512xf32> to vector<16x512xf32>
    %98 = arith.mulf %92, %97 : vector<16x512xf32>
    %c0_45 = arith.constant 0 : index
    %c0_46 = arith.constant 0 : index
    %99 = vector.load %arg12[%c0_45, %c0_46] : memref<32x512xf32, #tpu.memory_space<vmem>>, vector<16x512xf32>
    tpu.vector_store %arg12[%c0_45, %c0_46], %98 {strides = array<i32>} : memref<32x512xf32, #tpu.memory_space<vmem>>, vector<16x512xf32>,
    %c8_i32 = arith.constant 8 : i32
    %100 = vector.broadcast %c8_i32 : i32 to vector<1x512xi32>
    %101 = arith.cmpi eq, %16, %100 : vector<1x512xi32>
    %102 = arith.extui %101 : vector<1x512xi1> to vector<1x512xi32>
    %103 = arith.sitofp %102 : vector<1x512xi32> to vector<1x512xf32>
    %104 = vector.broadcast %103 : vector<1x512xf32> to vector<16x512xf32>
    %105 = arith.mulf %92, %104 : vector<16x512xf32>
    %c16_47 = arith.constant 16 : index
    %c0_48 = arith.constant 0 : index
    %106 = vector.load %arg12[%c16_47, %c0_48] : memref<32x512xf32, #tpu.memory_space<vmem>>, vector<16x512xf32>
    tpu.vector_store %arg12[%c16_47, %c0_48], %105 {strides = array<i32>} : memref<32x512xf32, #tpu.memory_space<vmem>>, vector<16x512xf32>,
    %c0_49 = arith.constant 0 : index
    %c0_50 = arith.constant 0 : index
    %107 = vector.load %arg6[%c0_49, %c0_50] : memref<3x32xf32, #tpu.memory_space<vmem>>, vector<3x32xf32>
    %c0_51 = arith.constant 0 : index
    %c0_52 = arith.constant 0 : index
    %108 = vector.load %arg12[%c0_51, %c0_52] : memref<32x512xf32, #tpu.memory_space<vmem>>, vector<32x512xf32>
    %cst_53 = arith.constant dense<0.000000e+00> : vector<3x512xf32>
    %109 = tpu.matmul %107, %108, %cst_53 {dimension_numbers = #tpu.dot_dimension_numbers<[1], [0], [0], [1], [0, 0, 1, 1], [], []>} : vector<3x32xf32>, vector<32x512xf32>, vector<3x512xf32> -> vector<3x512xf32>
    %c0_54 = arith.constant 0 : index
    %c0_55 = arith.constant 0 : index
    %110 = vector.load %arg8[%c0_54, %c0_55] : memref<512x32xf32, #tpu.memory_space<vmem>>, vector<512x32xf32>
    %cst_56 = arith.constant dense<0.000000e+00> : vector<3x32xf32>
    %111 = tpu.matmul %109, %110, %cst_56 {dimension_numbers = #tpu.dot_dimension_numbers<[1], [0], [0], [1], [0, 0, 1, 1], [], []>} : vector<3x512xf32>, vector<512x32xf32>, vector<3x32xf32> -> vector<3x32xf32>
    %c0_57 = arith.constant 0 : index
    %c0_58 = arith.constant 0 : index
    %112 = vector.load %arg7[%c0_57, %c0_58] : memref<3x1xf32, #tpu.memory_space<vmem>>, vector<3x1xf32>
    %113 = vector.broadcast %112 : vector<3x1xf32> to vector<3x32xf32>
    %114 = arith.addf %111, %113 : vector<3x32xf32>
    %115 = vector.shape_cast %114 : vector<3x32xf32> to vector<1x3x32xf32>
    %c0_59 = arith.constant 0 : index
    %c0_60 = arith.constant 0 : index
    %c0_61 = arith.constant 0 : index
    %116 = vector.load %arg9[%c0_59, %c0_60, %c0_61] : memref<1x3x32xf32, #tpu.memory_space<vmem>>, vector<1x3x32xf32>
    tpu.vector_store %arg9[%c0_59, %c0_60, %c0_61], %115 {strides = array<i32>} : memref<1x3x32xf32, #tpu.memory_space<vmem>>, vector<1x3x32xf32>,
    return
  }
  func.func @transform_0(%arg0: i32) -> (i32, i32) {
    %c0_i32 = arith.constant 0 : i32
    %c0_i32_0 = arith.constant 0 : i32
    return %c0_i32, %arg0 : i32, i32
  }
  func.func @transform_1(%arg0: i32) -> (i32, i32) {
    %c0_i32 = arith.constant 0 : i32
    %c0_i32_0 = arith.constant 0 : i32
    %c0_i32_1 = arith.constant 0 : i32
    return %c0_i32, %c0_i32_0 : i32, i32
  }
  func.func @transform_2(%arg0: i32) -> (i32, i32) {
    %c0_i32 = arith.constant 0 : i32
    %c0_i32_0 = arith.constant 0 : i32
    %c0_i32_1 = arith.constant 0 : i32
    return %c0_i32, %c0_i32_0 : i32, i32
  }
  func.func @transform_3(%arg0: i32) -> (i32, i32) {
    %c0_i32 = arith.constant 0 : i32
    %c0_i32_0 = arith.constant 0 : i32
    %c0_i32_1 = arith.constant 0 : i32
    return %c0_i32, %c0_i32_0 : i32, i32
  }
  func.func @transform_4(%arg0: i32) -> (i32, i32) {
    %c0_i32 = arith.constant 0 : i32
    %c0_i32_0 = arith.constant 0 : i32
    %c0_i32_1 = arith.constant 0 : i32
    return %c0_i32, %c0_i32_0 : i32, i32
  }
  func.func @transform_5(%arg0: i32) -> (i32, i32) {
    %c0_i32 = arith.constant 0 : i32
    %c0_i32_0 = arith.constant 0 : i32
    %c0_i32_1 = arith.constant 0 : i32
    return %c0_i32, %c0_i32_0 : i32, i32
  }
  func.func @transform_6(%arg0: i32) -> (i32, i32) {
    %c0_i32 = arith.constant 0 : i32
    %c0_i32_0 = arith.constant 0 : i32
    %c0_i32_1 = arith.constant 0 : i32
    return %c0_i32, %c0_i32_0 : i32, i32
  }
  func.func @transform_7(%arg0: i32) -> (i32, i32) {
    %c0_i32 = arith.constant 0 : i32
    %c0_i32_0 = arith.constant 0 : i32
    %c0_i32_1 = arith.constant 0 : i32
    return %c0_i32, %c0_i32_0 : i32, i32
  }
  func.func @transform_8(%arg0: i32) -> (i32, i32, i32) {
    %c0_i32 = arith.constant 0 : i32
    %c0_i32_0 = arith.constant 0 : i32
    %c0_i32_1 = arith.constant 0 : i32
    return %arg0, %c0_i32, %c0_i32_0 : i32, i32, i32
  }
}

</mosaic_0001>

<llo_original>
// kernel: eegnet_forward.1
$region0: #{eegnet_forward.1}
  #allocation0 [shape = 'u32[]', space=smem, size = 0x4, offset = 0x4, fixed_abs, tag = 'smem constant byte address 0x4 - core index']
  #allocation1 [shape = 'u32[144,128]{1,0:T(1,128)}', space=vmem, size = 0x12000, scoped, tag = 'internal scratch']
  #allocation2 [shape = 'f32[48,512]{1,0:T(8,128)}', space=vmem, size = 0x18000, scoped, tag = 'scratch operand']
  #allocation3 [shape = 'f32[32,512]{1,0:T(8,128)}', space=vmem, size = 0x10000, scoped, tag = 'scratch operand']
  #allocation4 [shape = 'f32[32,512]{1,0:T(8,128)}', space=vmem, size = 0x10000, scoped, tag = 'scratch operand']
  %s0 = inlined_call_operand.vmem [shape: f32[16,1024], index: 0, kind: input, shape index: {}]
  %s1 = inlined_call_operand.vmem [shape: f32[16,48], index: 1, kind: input, shape index: {}]
  %s2 = inlined_call_operand.vmem [shape: f32[16,1], index: 2, kind: input, shape index: {}]
  %s3 = inlined_call_operand.vmem [shape: f32[16,32], index: 3, kind: input, shape index: {}]
  %s4 = inlined_call_operand.vmem [shape: f32[16,1], index: 4, kind: input, shape index: {}]
  %s5 = inlined_call_operand.vmem [shape: f32[3,32], index: 5, kind: input, shape index: {}]
  %s6 = inlined_call_operand.vmem [shape: f32[3,1], index: 6, kind: input, shape index: {}]
  %s7 = inlined_call_operand.vmem [shape: f32[512,32], index: 7, kind: input, shape index: {}]
  %s8 = inlined_call_operand.vmem [shape: f32[2,3,32], index: 8, kind: output, shape index: {}]
  %s9 = sld [smem:[#allocation0]]
  $region88: #{eegnet_forward.1} parent=0
    _
  %s11 = ssub.s32 1, %s9
  %s12 = scalar_select 0, %s11, %s9
  $region1: #{eegnet_forward.1} parent=0
    #allocation5 [shape = 'u8[65536]{0}', space=vmem, size = 0x10000, scoped, tag = 'input window, operand 0']
    loop: start=0, step=1, limit=4
    $region2: #{eegnet_forward.1} parent=1 // loop_pre_header
      _
    $region3: #{eegnet_forward.1} parent=1 // loop_header
      %s14 = sphi 0, %s18
      %p15 = scmp.ge.s32.totalorder %s14, 4
      %s24 = sphi 0, %s26
      %s27 = sphi 0, %s24
      %s28 = sphi 0, %s27
      %s44 = sphi 0, %s28
      %s48 = sphi 0, %s48
      %s50 = sphi 0, %s48
      %s51 = sphi 0, %s50
      %s65 = sphi 0, %s51
      %s69 = sphi 0, %s69
      %s71 = sphi 0, %s69
      %s72 = sphi 0, %s71
      %s86 = sphi 0, %s72
      %s90 = sphi 0, %s90
      %s92 = sphi 0, %s90
      %s93 = sphi 0, %s92
      %s107 = sphi 0, %s93
      %s111 = sphi 0, %s111
      %s113 = sphi 0, %s111
      %s114 = sphi 0, %s113
      %s128 = sphi 0, %s114
      %s132 = sphi 0, %s132
      %s134 = sphi 0, %s132
      %s135 = sphi 0, %s134
      %s149 = sphi 0, %s135
      %s153 = sphi 0, %s153
      %s155 = sphi 0, %s153
      %s156 = sphi 0, %s155
      %s170 = sphi 0, %s156
      %s174 = sphi 0, %s174
      %s176 = sphi 0, %s174
      %s177 = sphi 0, %s176
      %s191 = sphi 0, %s177
      %s197 = sphi 0, %s199
      %s200 = sphi 0, %s197
      %s201 = sphi 0, %s200
      %s217 = sphi 0, %s201
    $region4: #{eegnet_forward.1} parent=1 // loop_header_branch
      %17 = sbr.rel (%p15) target = $region8
    $region5: #{eegnet_forward.1} parent=1 // loop_body
      %s19 = ssub.s32 %s14, 1
      %s20 = ssub.s32 %s14, 2
      %s21 = sadd.s32 %s14, 1
      %s22 = ssub.s32 %s14, %s21
      %p23 = scmp.eq.s32.totalorder %s22, 0
      %s25 = sadd.s32 %s24, 1
      %s26 = scalar_select %p23, %s24, %s25
      %p29 = pneg %p23
      %p30 = scmp.eq.s32.totalorder %s14, 1
      %p31 = por %p29, %p30
      %p32 = scmp.ne.s32.totalorder %s24, %s27
      %p33 = scmp.eq.s32.totalorder %s14, 0
      %p34 = por %p32, %p33
      %p35 = scmp.ne.s32.totalorder %s24, %s27
      %p36 = scmp.eq.s32.totalorder %s19, 1
      %p37 = por %p35, %p36
      %p38 = scmp.ne.s32.totalorder %s27, %s28
      %p39 = scmp.eq.s32.totalorder %s19, 0
      %p40 = por %p38, %p39
      %p41 = scmp.ne.s32.totalorder %s27, %s28
      %p42 = scmp.eq.s32.totalorder %s20, 1
      %p43 = por %p41, %p42
      %p45 = scmp.ne.s32.totalorder %s28, %s44
      %p46 = scmp.eq.s32.totalorder %s20, 0
      %p47 = por %p45, %p46
      %s49 = sadd.s32 %s48, 1
      %p52 = scmp.eq.s32.totalorder %s14, 1
      %p53 = scmp.ne.s32.totalorder %s48, %s50
      %p54 = scmp.eq.s32.totalorder %s14, 0
      %p55 = por %p53, %p54
      %p56 = scmp.ne.s32.totalorder %s48, %s50
      %p57 = scmp.eq.s32.totalorder %s19, 1
      %p58 = por %p56, %p57
      %p59 = scmp.ne.s32.totalorder %s50, %s51
      %p60 = scmp.eq.s32.totalorder %s19, 0
      %p61 = por %p59, %p60
      %p62 = scmp.ne.s32.totalorder %s50, %s51
      %p63 = scmp.eq.s32.totalorder %s20, 1
      %p64 = por %p62, %p63
      %p66 = scmp.ne.s32.totalorder %s51, %s65
      %p67 = scmp.eq.s32.totalorder %s20, 0
      %p68 = por %p66, %p67
      %s70 = sadd.s32 %s69, 1
      %p73 = scmp.eq.s32.totalorder %s14, 1
      %p74 = scmp.ne.s32.totalorder %s69, %s71
      %p75 = scmp.eq.s32.totalorder %s14, 0
      %p76 = por %p74, %p75
      %p77 = scmp.ne.s32.totalorder %s69, %s71
      %p78 = scmp.eq.s32.totalorder %s19, 1
      %p79 = por %p77, %p78
      %p80 = scmp.ne.s32.totalorder %s71, %s72
      %p81 = scmp.eq.s32.totalorder %s19, 0
      %p82 = por %p80, %p81
      %p83 = scmp.ne.s32.totalorder %s71, %s72
      %p84 = scmp.eq.s32.totalorder %s20, 1
      %p85 = por %p83, %p84
      %p87 = scmp.ne.s32.totalorder %s72, %s86
      %p88 = scmp.eq.s32.totalorder %s20, 0
      %p89 = por %p87, %p88
      %s91 = sadd.s32 %s90, 1
      %p94 = scmp.eq.s32.totalorder %s14, 1
      %p95 = scmp.ne.s32.totalorder %s90, %s92
      %p96 = scmp.eq.s32.totalorder %s14, 0
      %p97 = por %p95, %p96
      %p98 = scmp.ne.s32.totalorder %s90, %s92
      %p99 = scmp.eq.s32.totalorder %s19, 1
      %p100 = por %p98, %p99
      %p101 = scmp.ne.s32.totalorder %s92, %s93
      %p102 = scmp.eq.s32.totalorder %s19, 0
      %p103 = por %p101, %p102
      %p104 = scmp.ne.s32.totalorder %s92, %s93
      %p105 = scmp.eq.s32.totalorder %s20, 1
      %p106 = por %p104, %p105
      %p108 = scmp.ne.s32.totalorder %s93, %s107
      %p109 = scmp.eq.s32.totalorder %s20, 0
      %p110 = por %p108, %p109
      %s112 = sadd.s32 %s111, 1
      %p115 = scmp.eq.s32.totalorder %s14, 1
      %p116 = scmp.ne.s32.totalorder %s111, %s113
      %p117 = scmp.eq.s32.totalorder %s14, 0
      %p118 = por %p116, %p117
      %p119 = scmp.ne.s32.totalorder %s111, %s113
      %p120 = scmp.eq.s32.totalorder %s19, 1
      %p121 = por %p119, %p120
      %p122 = scmp.ne.s32.totalorder %s113, %s114
      %p123 = scmp.eq.s32.totalorder %s19, 0
      %p124 = por %p122, %p123
      %p125 = scmp.ne.s32.totalorder %s113, %s114
      %p126 = scmp.eq.s32.totalorder %s20, 1
      %p127 = por %p125, %p126
      %p129 = scmp.ne.s32.totalorder %s114, %s128
      %p130 = scmp.eq.s32.totalorder %s20, 0
      %p131 = por %p129, %p130
      %s133 = sadd.s32 %s132, 1
      %p136 = scmp.eq.s32.totalorder %s14, 1
      %p137 = scmp.ne.s32.totalorder %s132, %s134
      %p138 = scmp.eq.s32.totalorder %s14, 0
      %p139 = por %p137, %p138
      %p140 = scmp.ne.s32.totalorder %s132, %s134
      %p141 = scmp.eq.s32.totalorder %s19, 1
      %p142 = por %p140, %p141
      %p143 = scmp.ne.s32.totalorder %s134, %s135
      %p144 = scmp.eq.s32.totalorder %s19, 0
      %p145 = por %p143, %p144
      %p146 = scmp.ne.s32.totalorder %s134, %s135
      %p147 = scmp.eq.s32.totalorder %s20, 1
      %p148 = por %p146, %p147
      %p150 = scmp.ne.s32.totalorder %s135, %s149
      %p151 = scmp.eq.s32.totalorder %s20, 0
      %p152 = por %p150, %p151
      %s154 = sadd.s32 %s153, 1
      %p157 = scmp.eq.s32.totalorder %s14, 1
      %p158 = scmp.ne.s32.totalorder %s153, %s155
      %p159 = scmp.eq.s32.totalorder %s14, 0
      %p160 = por %p158, %p159
      %p161 = scmp.ne.s32.totalorder %s153, %s155
      %p162 = scmp.eq.s32.totalorder %s19, 1
      %p163 = por %p161, %p162
      %p164 = scmp.ne.s32.totalorder %s155, %s156
      %p165 = scmp.eq.s32.totalorder %s19, 0
      %p166 = por %p164, %p165
      %p167 = scmp.ne.s32.totalorder %s155, %s156
      %p168 = scmp.eq.s32.totalorder %s20, 1
      %p169 = por %p167, %p168
      %p171 = scmp.ne.s32.totalorder %s156, %s170
      %p172 = scmp.eq.s32.totalorder %s20, 0
      %p173 = por %p171, %p172
      %s175 = sadd.s32 %s174, 1
      %p178 = scmp.eq.s32.totalorder %s14, 1
      %p179 = scmp.ne.s32.totalorder %s174, %s176
      %p180 = scmp.eq.s32.totalorder %s14, 0
      %p181 = por %p179, %p180
      %p182 = scmp.ne.s32.totalorder %s174, %s176
      %p183 = scmp.eq.s32.totalorder %s19, 1
      %p184 = por %p182, %p183
      %p185 = scmp.ne.s32.totalorder %s176, %s177
      %p186 = scmp.eq.s32.totalorder %s19, 0
      %p187 = por %p185, %p186
      %p188 = scmp.ne.s32.totalorder %s176, %s177
      %p189 = scmp.eq.s32.totalorder %s20, 1
      %p190 = por %p188, %p189
      %p192 = scmp.ne.s32.totalorder %s177, %s191
      %p193 = scmp.eq.s32.totalorder %s20, 0
      %p194 = por %p192, %p193
      %s195 = ssub.s32 %s14, %s21
      %p196 = scmp.eq.s32.totalorder %s195, 0
      %s198 = sadd.s32 %s197, 1
      %s199 = scalar_select %p196, %s197, %s198
      %p202 = pneg %p196
      %p203 = scmp.eq.s32.totalorder %s14, 1
      %p204 = por %p202, %p203
      %p205 = scmp.ne.s32.totalorder %s197, %s200
      %p206 = scmp.eq.s32.totalorder %s14, 0
      %p207 = por %p205, %p206
      %p208 = scmp.ne.s32.totalorder %s197, %s200
      %p209 = scmp.eq.s32.totalorder %s19, 1
      %p210 = por %p208, %p209
      %p211 = scmp.ne.s32.totalorder %s200, %s201
      %p212 = scmp.eq.s32.totalorder %s19, 0
      %p213 = por %p211, %p212
      %p214 = scmp.ne.s32.totalorder %s200, %s201
      %p215 = scmp.eq.s32.totalorder %s20, 1
      %p216 = por %p214, %p215
      %p218 = scmp.ne.s32.totalorder %s201, %s217
      %p219 = scmp.eq.s32.totalorder %s20, 0
      %p220 = por %p218, %p219
      %p221 = scmp.le.s32.totalorder 1, %s14
      %p222 = scmp.lt.s32.totalorder %s14, 3
      %p223 = pnand %p221, %p222
      %p224 = pneg %p223
      // Predicated region
      $region9: #{eegnet_forward.1} parent=5 // pred_check
        _
      $region10: #{eegnet_forward.1} parent=5 // pred_check_branch
        %226 = sbr.rel (%p223) target = $region12
      $region11: #{eegnet_forward.1} parent=5 // pred_region
        %s227 = ssub.s32 %s14, 1
        // Predicated region
        $region13: #{eegnet_forward.1} parent=11 // pred_check
          %p228 = pneg %p61
        $region14: #{eegnet_forward.1} parent=11 // pred_check_branch
          %230 = sbr.rel (%p228) target = $region16
        $region15: #{eegnet_forward.1} parent=11 // pred_region
          _
        $region16: #{eegnet_forward.1} parent=11 // pred_fallthru
          _
        // Predicated region
        $region17: #{eegnet_forward.1} parent=11 // pred_check
          %p231 = pneg %p82
        $region18: #{eegnet_forward.1} parent=11 // pred_check_branch
          %233 = sbr.rel (%p231) target = $region20
        $region19: #{eegnet_forward.1} parent=11 // pred_region
          _
        $region20: #{eegnet_forward.1} parent=11 // pred_fallthru
          _
        // Predicated region
        $region21: #{eegnet_forward.1} parent=11 // pred_check
          %p234 = pneg %p103
        $region22: #{eegnet_forward.1} parent=11 // pred_check_branch
          %236 = sbr.rel (%p234) target = $region24
        $region23: #{eegnet_forward.1} parent=11 // pred_region
          _
        $region24: #{eegnet_forward.1} parent=11 // pred_fallthru
          _
        // Predicated region
        $region25: #{eegnet_forward.1} parent=11 // pred_check
          %p237 = pneg %p124
        $region26: #{eegnet_forward.1} parent=11 // pred_check_branch
          %239 = sbr.rel (%p237) target = $region28
        $region27: #{eegnet_forward.1} parent=11 // pred_region
          _
        $region28: #{eegnet_forward.1} parent=11 // pred_fallthru
          _
        // Predicated region
        $region29: #{eegnet_forward.1} parent=11 // pred_check
          %p240 = pneg %p145
        $region30: #{eegnet_forward.1} parent=11 // pred_check_branch
          %242 = sbr.rel (%p240) target = $region32
        $region31: #{eegnet_forward.1} parent=11 // pred_region
          _
        $region32: #{eegnet_forward.1} parent=11 // pred_fallthru
          _
        // Predicated region
        $region33: #{eegnet_forward.1} parent=11 // pred_check
          %p243 = pneg %p166
        $region34: #{eegnet_forward.1} parent=11 // pred_check_branch
          %245 = sbr.rel (%p243) target = $region36
        $region35: #{eegnet_forward.1} parent=11 // pred_region
          _
        $region36: #{eegnet_forward.1} parent=11 // pred_fallthru
          _
        // Predicated region
        $region37: #{eegnet_forward.1} parent=11 // pred_check
          %p246 = pneg %p187
        $region38: #{eegnet_forward.1} parent=11 // pred_check_branch
          %248 = sbr.rel (%p246) target = $region40
        $region39: #{eegnet_forward.1} parent=11 // pred_region
          _
        $region40: #{eegnet_forward.1} parent=11 // pred_fallthru
          _
      $region12: #{eegnet_forward.1} parent=5 // pred_fallthru
        _
      %p249 = scmp.lt.s32.totalorder %s14, 2
      // Predicated region
      $region41: #{eegnet_forward.1} parent=5 // pred_check
        %p250 = pneg %p249
      $region42: #{eegnet_forward.1} parent=5 // pred_check_branch
        %252 = sbr.rel (%p250) target = $region44
      $region43: #{eegnet_forward.1} parent=5 // pred_region
        // Predicated region
        $region45: #{eegnet_forward.1} parent=43 // pred_check
          %p253 = pneg %p34
        $region46: #{eegnet_forward.1} parent=43 // pred_check_branch
          %255 = sbr.rel (%p253) target = $region48
        $region47: #{eegnet_forward.1} parent=43 // pred_region
          %s256 = sand.u32 %s24, 1
          %s257 = sand.u32 %s24, 1
          %s258 = smul.addr %s257, 64
          %s259 = scalar_lea.vmem [#allocation5], %s258
          %s260 = smul.u32 4, %s14
          %s261 = smul.addr %s260, 8
          %s262 = scalar_lea.vmem %s0, %s261
          // Predicated region
          $region49: #{eegnet_forward.1} parent=47 // pred_check
            _
          $region50: #{eegnet_forward.1} parent=47 // pred_check_branch
            %264 = sbr.rel (0) target = $region52
          $region51: #{eegnet_forward.1} parent=47 // pred_region
            // Predicated region
            $region53: #{eegnet_forward.1} parent=51 // pred_check
              _
            $region54: #{eegnet_forward.1} parent=51 // pred_check_branch
              %266 = sbr.rel (0) target = $region56
            $region55: #{eegnet_forward.1} parent=51 // pred_region
              loop: start=0, step=1, limit=1
              $region57: #{eegnet_forward.1} parent=55 // loop_pre_header
                _
              $region58: #{eegnet_forward.1} parent=55 // loop_header
                %s268 = sphi 0, %s272
                %p269 = scmp.ge.s32.totalorder %s268, 1
                %s273 = sphi %s262, %s262
                %s274 = sphi %s259, %s259
              $region59: #{eegnet_forward.1} parent=55 // loop_header_branch
                %271 = sbr.rel (%p269) target = $region63
              $region60: #{eegnet_forward.1} parent=55 // loop_body
                %v275 = vld [vmem:[%s273] sm:$0xff]
                %276 = vst [vmem:[%s274] sm:$0xff] %v275
                %v277 = vld [vmem:[%s273 + $0x8] sm:$0xff]
                %278 = vst [vmem:[%s274 + $0x8] sm:$0xff] %v277
                %v279 = vld [vmem:[%s273 + $0x10] sm:$0xff]
                %280 = vst [vmem:[%s274 + $0x10] sm:$0xff] %v279
                %v281 = vld [vmem:[%s273 + $0x18] sm:$0xff]
                %282 = vst [vmem:[%s274 + $0x18] sm:$0xff] %v281
                %v283 = vld [vmem:[%s273 + $0x40] sm:$0xff]
                %284 = vst [vmem:[%s274 + $0x20] sm:$0xff] %v283
                %v285 = vld [vmem:[%s273 + $0x48] sm:$0xff]
                %286 = vst [vmem:[%s274 + $0x28] sm:$0xff] %v285
                %v287 = vld [vmem:[%s273 + $0x50] sm:$0xff]
                %288 = vst [vmem:[%s274 + $0x30] sm:$0xff] %v287
                %v289 = vld [vmem:[%s273 + $0x58] sm:$0xff]
                %290 = vst [vmem:[%s274 + $0x38] sm:$0xff] %v289
              $region61: #{eegnet_forward.1} parent=55 // loop_footer
                %s272 = sadd.s32 1, %s268
              $region62: #{eegnet_forward.1} parent=55 // loop_footer_branch
                %267 = sbr.rel target = $region58
              $region63: #{eegnet_forward.1} parent=55 // loop_exit
                _
            $region56: #{eegnet_forward.1} parent=51 // pred_fallthru
              _
            // Predicated region
            $region64: #{eegnet_forward.1} parent=51 // pred_check
              _
            $region65: #{eegnet_forward.1} parent=51 // pred_check_branch
              %292 = sbr.rel target = $region67
            $region66: #{eegnet_forward.1} parent=51 // pred_region
              _
            $region67: #{eegnet_forward.1} parent=51 // pred_fallthru
              _
          $region52: #{eegnet_forward.1} parent=47 // pred_fallthru
            _
          %293 = vnop
        $region48: #{eegnet_forward.1} parent=43 // pred_fallthru
          _
      $region44: #{eegnet_forward.1} parent=5 // pred_fallthru
        _
      %p294 = scmp.le.s32.totalorder 1, %s14
      %p295 = scmp.lt.s32.totalorder %s14, 3
      %p296 = pnand %p294, %p295
      %p297 = pneg %p296
      // Predicated region
      $region68: #{eegnet_forward.1} parent=5 // pred_check
        _
      $region69: #{eegnet_forward.1} parent=5 // pred_check_branch
        %299 = sbr.rel (%p296) target = $region71
      $region70: #{eegnet_forward.1} parent=5 // pred_region
        %s300 = ssub.s32 %s14, 1
        %s301 = sand.u32 %s27, 1
        %s302 = sand.u32 %s27, 1
        %s303 = smul.addr %s302, 64
        %s304 = scalar_lea.vmem [#allocation5], %s303
        // Predicated region
        $region72: #{eegnet_forward.1} parent=70 // pred_check
          %p305 = pneg %p40
        $region73: #{eegnet_forward.1} parent=70 // pred_check_branch
          %307 = sbr.rel (%p305) target = $region75
        $region74: #{eegnet_forward.1} parent=70 // pred_region
          _
        $region75: #{eegnet_forward.1} parent=70 // pred_fallthru
          _
        %s308 = sand.u32 %s27, 1
        %s309 = sand.u32 %s27, 1
        %s310 = smul.addr %s309, 64
        %s311 = scalar_lea.vmem [#allocation5], %s310
        %p312 = pneg %p40
        %p313 = pneg %p37
        %p314 = pneg %p61
        %p315 = pneg %p58
        %p316 = pneg %p82
        %p317 = pneg %p79
        %p318 = pneg %p103
        %p319 = pneg %p100
        %p320 = pneg %p124
        %p321 = pneg %p121
        %p322 = pneg %p145
        %p323 = pneg %p142
        %p324 = pneg %p166
        %p325 = pneg %p163
        %p326 = pneg %p187
        %p327 = pneg %p184
        %p328 = pneg %p213
        %p329 = pneg %p210
        %p330 = scmp.lt.s32.totalorder %s19, 1
        %s331 = scalar_select %p330, %s19, 1
        %s332 = smul.addr %s331, 4
        %s333 = scalar_lea.vmem %s8, %s332
        %s334 = smul.u32 4, %s19
        %p335 = scmp.lt.s32.totalorder %s19, 1
        %s336 = scalar_select %p335, %s19, 1
        %s337 = smul.addr %s336, 4
        %s338 = scalar_lea.vmem %s8, %s337
        %v339 = vlaneseq
        %v340 = vand.u32 %v339, 127
        %v341 = vadd.s32 %v340, 128
        %v342 = vadd.s32 %v340, 256
        %v343 = vadd.s32 %v340, 384
        %vm344 = vcmp.lt.s32.totalorder %v340, 0
        %v345 = vsub.s32 0, %v340
        %v346 = vsel %vm344, %v345, %v340
        %v347 = vshrl.u32 %v346, 4
        %v348 = vand.u32 %v346, 15
        %v349 = vsub.s32 0, %v348
        %v350 = vsel %vm344, %v349, %v348
        %vm351 = vcmp.lt.s32.totalorder %v341, 0
        %v352 = vsub.s32 0, %v341
        %v353 = vsel %vm351, %v352, %v341
        %v354 = vshrl.u32 %v353, 4
        %v355 = vand.u32 %v353, 15
        %v356 = vsub.s32 0, %v355
        %v357 = vsel %vm351, %v356, %v355
        %vm358 = vcmp.lt.s32.totalorder %v342, 0
        %v359 = vsub.s32 0, %v342
        %v360 = vsel %vm358, %v359, %v342
        %v361 = vshrl.u32 %v360, 4
        %v362 = vand.u32 %v360, 15
        %v363 = vsub.s32 0, %v362
        %v364 = vsel %vm358, %v363, %v362
        %vm365 = vcmp.lt.s32.totalorder %v343, 0
        %v366 = vsub.s32 0, %v343
        %v367 = vsel %vm365, %v366, %v343
        %v368 = vshrl.u32 %v367, 4
        %v369 = vand.u32 %v367, 15
        %v370 = vsub.s32 0, %v369
        %v371 = vsel %vm365, %v370, %v369
        %vm372 = vcmp.ne.s32.totalorder %v350, 0
        %vm373 = vcmp.ne.s32.totalorder %v357, 0
        %vm374 = vcmp.ne.s32.totalorder %v364, 0
        %vm375 = vcmp.ne.s32.totalorder %v371, 0
        %vm376 = vcmp.lt.s32.totalorder %v350, 0
        %vm377 = vcmp.lt.s32.totalorder %v357, 0
        %vm378 = vcmp.lt.s32.totalorder %v364, 0
        %vm379 = vcmp.lt.s32.totalorder %v371, 0
        %vm380 = vmand %vm376, %vm372
        %vm381 = vmand %vm377, %vm373
        %vm382 = vmand %vm378, %vm374
        %vm383 = vmand %vm379, %vm375
        %v384 = vadd.s32 %v350, 16
        %v385 = vadd.s32 %v357, 16
        %v386 = vadd.s32 %v364, 16
        %v387 = vadd.s32 %v371, 16
        %v388 = vsel %vm380, %v384, %v350
        %v389 = vsel %vm381, %v385, %v357
        %v390 = vsel %vm382, %v386, %v364
        %v391 = vsel %vm383, %v387, %v371
        %v392 = vld [vmem:[%s304] sm:$0xff]
        %v393 = vld [vmem:[%s304 + $0x8] sm:$0xff]
        %v394 = vld [vmem:[%s304 + $0x10] sm:$0xff]
        %v395 = vld [vmem:[%s304 + $0x18] sm:$0xff]
        %v396 = vld [vmem:[%s304 + $0x20] sm:$0xff]
        %v397 = vld [vmem:[%s304 + $0x28] sm:$0xff]
        %v398 = vld [vmem:[%s304 + $0x30] sm:$0xff]
        %v399 = vld [vmem:[%s304 + $0x38] sm:$0xff]
        %400 = vrot.lane.b32.xlu0 %v392, 1
        %v401 = vpop.permute.xlu0 %400
        %402 = vrot.lane.b32.xlu0 %v396, 1
        %v403 = vpop.permute.xlu0 %402
        %404 = vrot.lane.b32.xlu0 %v393, 1
        %v405 = vpop.permute.xlu0 %404
        %406 = vrot.lane.b32.xlu0 %v397, 1
        %v407 = vpop.permute.xlu0 %406
        %408 = vrot.lane.b32.xlu0 %v394, 1
        %v409 = vpop.permute.xlu0 %408
        %410 = vrot.lane.b32.xlu0 %v398, 1
        %v411 = vpop.permute.xlu0 %410
        %412 = vrot.lane.b32.xlu0 %v395, 1
        %v413 = vpop.permute.xlu0 %412
        %414 = vrot.lane.b32.xlu0 %v399, 1
        %v415 = vpop.permute.xlu0 %414
        %vm416 = vcmp.lt.s32.totalorder %v340, 1
        %v417 = vsel %vm416, %v409, %v413
        %v418 = vsel %vm416, %v411, %v415
        %v419 = vsel %vm416, %v405, %v409
        %v420 = vsel %vm416, %v407, %v411
        %v421 = vsel %vm416, %v401, %v405
        %v422 = vsel %vm416, %v403, %v407
        %v423 = vsel %vm416, %v413, %v401
        %v424 = vsel %vm416, %v415, %v403
        %v425 = vadd.s32 %v388, 4294967295
        %v426 = vadd.s32 %v389, 4294967295
        %v427 = vadd.s32 %v390, 4294967295
        %v428 = vadd.s32 %v391, 4294967295
        %vm429 = vcmp.ge.s32.totalorder %v425, 0
        %vm430 = vcmp.ge.s32.totalorder %v426, 0
        %vm431 = vcmp.ge.s32.totalorder %v427, 0
        %vm432 = vcmp.ge.s32.totalorder %v428, 0
        %vm433 = vcmp.lt.s32.totalorder %v425, 16
        %vm434 = vcmp.lt.s32.totalorder %v426, 16
        %vm435 = vcmp.lt.s32.totalorder %v427, 16
        %vm436 = vcmp.lt.s32.totalorder %v428, 16
        %vm437 = vmand %vm429, %vm433
        %vm438 = vmand %vm430, %vm434
        %vm439 = vmand %vm431, %vm435
        %vm440 = vmand %vm432, %vm436
        %v441 = vsel %vm437, 1, 0
        %v442 = vsel %vm438, 1, 0
        %v443 = vsel %vm439, 1, 0
        %v444 = vsel %vm440, 1, 0
        %v445 = vcvt.s32.f32 %v441
        %v446 = vcvt.s32.f32 %v442
        %v447 = vcvt.s32.f32 %v443
        %v448 = vcvt.s32.f32 %v444
        %v449 = vmul.f32 %v423, %v445
        %v450 = vmul.f32 %v421, %v446
        %v451 = vmul.f32 %v419, %v447
        %v452 = vmul.f32 %v417, %v448
        %v453 = vmul.f32 %v424, %v445
        %v454 = vmul.f32 %v422, %v446
        %v455 = vmul.f32 %v420, %v447
        %v456 = vmul.f32 %v418, %v448
        %457 = vst [vmem:[#allocation2] sm:$0xff] %v449
        %458 = vst [vmem:[#allocation2 + $0x8] sm:$0xff] %v450
        %459 = vst [vmem:[#allocation2 + $0x10] sm:$0xff] %v451
        %460 = vst [vmem:[#allocation2 + $0x18] sm:$0xff] %v452
        %461 = vst [vmem:[#allocation2 + $0x20] sm:$0xff] %v453
        %462 = vst [vmem:[#allocation2 + $0x28] sm:$0xff] %v454
        %463 = vst [vmem:[#allocation2 + $0x30] sm:$0xff] %v455
        %464 = vst [vmem:[#allocation2 + $0x38] sm:$0xff] %v456
        %465 = vst [vmem:[#allocation2 + $0x40] sm:$0xff] %v392
        %466 = vst [vmem:[#allocation2 + $0x48] sm:$0xff] %v393
        %467 = vst [vmem:[#allocation2 + $0x50] sm:$0xff] %v394
        %468 = vst [vmem:[#allocation2 + $0x58] sm:$0xff] %v395
        %469 = vst [vmem:[#allocation2 + $0x60] sm:$0xff] %v396
        %470 = vst [vmem:[#allocation2 + $0x68] sm:$0xff] %v397
        %471 = vst [vmem:[#allocation2 + $0x70] sm:$0xff] %v398
        %472 = vst [vmem:[#allocation2 + $0x78] sm:$0xff] %v399
        %473 = vrot.lane.b32.xlu0 %v392, 127
        %v474 = vpop.permute.xlu0 %473
        %475 = vrot.lane.b32.xlu0 %v396, 127
        %v476 = vpop.permute.xlu0 %475
        %477 = vrot.lane.b32.xlu0 %v393, 127
        %v478 = vpop.permute.xlu0 %477
        %479 = vrot.lane.b32.xlu0 %v397, 127
        %v480 = vpop.permute.xlu0 %479
        %481 = vrot.lane.b32.xlu0 %v394, 127
        %v482 = vpop.permute.xlu0 %481
        %483 = vrot.lane.b32.xlu0 %v398, 127
        %v484 = vpop.permute.xlu0 %483
        %485 = vrot.lane.b32.xlu0 %v395, 127
        %v486 = vpop.permute.xlu0 %485
        %487 = vrot.lane.b32.xlu0 %v399, 127
        %v488 = vpop.permute.xlu0 %487
        %vm489 = vcmp.lt.s32.totalorder %v340, 127
        %v490 = vsel %vm489, %v482, %v486
        %v491 = vsel %vm489, %v484, %v488
        %v492 = vsel %vm489, %v478, %v482
        %v493 = vsel %vm489, %v480, %v484
        %v494 = vsel %vm489, %v474, %v478
        %v495 = vsel %vm489, %v476, %v480
        %v496 = vsel %vm489, %v486, %v474
        %v497 = vsel %vm489, %v488, %v476
        %v498 = vadd.s32 %v388, 1
        %v499 = vadd.s32 %v389, 1
        %v500 = vadd.s32 %v390, 1
        %v501 = vadd.s32 %v391, 1
        %vm502 = vcmp.ge.s32.totalorder %v498, 0
        %vm503 = vcmp.ge.s32.totalorder %v499, 0
        %vm504 = vcmp.ge.s32.totalorder %v500, 0
        %vm505 = vcmp.ge.s32.totalorder %v501, 0
        %vm506 = vcmp.lt.s32.totalorder %v498, 16
        %vm507 = vcmp.lt.s32.totalorder %v499, 16
        %vm508 = vcmp.lt.s32.totalorder %v500, 16
        %vm509 = vcmp.lt.s32.totalorder %v501, 16
        %vm510 = vmand %vm502, %vm506
        %vm511 = vmand %vm503, %vm507
        %vm512 = vmand %vm504, %vm508
        %vm513 = vmand %vm505, %vm509
        %v514 = vsel %vm510, 1, 0
        %v515 = vsel %vm511, 1, 0
        %v516 = vsel %vm512, 1, 0
        %v517 = vsel %vm513, 1, 0
        %v518 = vcvt.s32.f32 %v514
        %v519 = vcvt.s32.f32 %v515
        %v520 = vcvt.s32.f32 %v516
        %v521 = vcvt.s32.f32 %v517
        %v522 = vmul.f32 %v494, %v518
        %v523 = vmul.f32 %v492, %v519
        %v524 = vmul.f32 %v490, %v520
        %v525 = vmul.f32 %v496, %v521
        %v526 = vmul.f32 %v495, %v518
        %v527 = vmul.f32 %v493, %v519
        %v528 = vmul.f32 %v491, %v520
        %v529 = vmul.f32 %v497, %v521
        %530 = vst [vmem:[#allocation2 + $0x80] sm:$0xff] %v522
        %531 = vst [vmem:[#allocation2 + $0x88] sm:$0xff] %v523
        %532 = vst [vmem:[#allocation2 + $0x90] sm:$0xff] %v524
        %533 = vst [vmem:[#allocation2 + $0x98] sm:$0xff] %v525
        %534 = vst [vmem:[#allocation2 + $0xa0] sm:$0xff] %v526
        %535 = vst [vmem:[#allocation2 + $0xa8] sm:$0xff] %v527
        %536 = vst [vmem:[#allocation2 + $0xb0] sm:$0xff] %v528
        %537 = vst [vmem:[#allocation2 + $0xb8] sm:$0xff] %v529
        %v538 = vld [vmem:[%s1] sm:$0xff]
        %v539 = vld [vmem:[%s1 + $0x8] sm:$0xff]
        %v540 = vld [vmem:[#allocation2] sm:$0xff]
        %v541 = vld [vmem:[#allocation2 + $0x8] sm:$0xff]
        %v542 = vld [vmem:[#allocation2 + $0x10] sm:$0xff]
        %v543 = vld [vmem:[#allocation2 + $0x18] sm:$0xff]
        %v544 = vld [vmem:[#allocation2 + $0x20] sm:$0xff]
        %v545 = vld [vmem:[#allocation2 + $0x28] sm:$0xff]
        %v546 = vld [vmem:[#allocation2 + $0x30] sm:$0xff]
        %v547 = vld [vmem:[#allocation2 + $0x38] sm:$0xff]
        %v548 = vld [vmem:[#allocation2 + $0x40] sm:$0xff]
        %v549 = vld [vmem:[#allocation2 + $0x48] sm:$0xff]
        %v550 = vld [vmem:[#allocation2 + $0x50] sm:$0xff]
        %v551 = vld [vmem:[#allocation2 + $0x58] sm:$0xff]
        %v552 = vld [vmem:[#allocation2 + $0x60] sm:$0xff]
        %v553 = vld [vmem:[#allocation2 + $0x68] sm:$0xff]
        %v554 = vld [vmem:[#allocation2 + $0x70] sm:$0xff]
        %v555 = vld [vmem:[#allocation2 + $0x78] sm:$0xff]
        %v556 = vld [vmem:[#allocation2 + $0x80] sm:$0xff]
        %v557 = vld [vmem:[#allocation2 + $0x88] sm:$0xff]
        %v558 = vld [vmem:[#allocation2 + $0x90] sm:$0xff]
        %v559 = vld [vmem:[#allocation2 + $0x98] sm:$0xff]
        %v560 = vld [vmem:[#allocation2 + $0xa0] sm:$0xff]
        %v561 = vld [vmem:[#allocation2 + $0xa8] sm:$0xff]
        %v562 = vld [vmem:[#allocation2 + $0xb0] sm:$0xff]
        %v563 = vld [vmem:[#allocation2 + $0xb8] sm:$0xff]
        %v564 = vld [vmem:[%s2] sm:$0xff]
        %v565 = vld [vmem:[%s2 + $0x8] sm:$0xff]
        %567 = vset.pattern.permute.xlu0 0
        %568 = vperm.xlu0 %567, %v564
        %v569 = vpop.permute.xlu0 %568
        %572 = vset.pattern.permute.xlu0 0
        %573 = vperm.xlu0 %572, %v565
        %v574 = vpop.permute.xlu0 %573
        %vm576 = vcmask 392192
        %v578 = vsel %vm576, %v538, 0
        %v581 = vsel %vm576, %v539, 0
        %583 = vmatprep.subr.mxu0 %v541
        %584 = vmatpush1.msra.mxu0 %v540
        %585 = vmatprep.subr.mxu0 %v545
        %586 = vmatpush1.msra.mxu0 %v544
        %587 = vmatprep.subr.mxu0 %v549
        %588 = vmatpush1.msra.mxu0 %v548
        %589 = vmatprep.subr.mxu0 %v553
        %590 = vmatpush1.msra.mxu0 %v552
        %591 = vmatprep.subr.mxu0 %v557
        %592 = vmatpush1.msra.mxu0 %v556
        %593 = vmatprep.subr.mxu0 %v561
        %594 = vmatpush1.msra.mxu0 %v560
        %595 = vmatprep.subr.mxu0 0.0
        %596 = vmatpush1.msra.mxu0 0.0
        %597 = vmatprep.subr.mxu0 0.0
        %598 = vmatpush1.msra.mxu0 0.0
        %599 = vmatprep.subr.mxu0 0.0
        %600 = vmatpush1.msra.mxu0 0.0
        %601 = vmatprep.subr.mxu0 0.0
        %602 = vmatpush1.msra.mxu0 0.0
        %603 = vmatprep.subr.mxu0 0.0
        %604 = vmatpush1.msra.mxu0 0.0
        %605 = vmatprep.subr.mxu0 0.0
        %606 = vmatpush1.msra.mxu0 0.0
        %607 = vmatprep.subr.mxu0 0.0
        %608 = vmatpush1.msra.mxu0 0.0
        %609 = vmatprep.subr.mxu0 0.0
        %610 = vmatpush1.msra.mxu0 0.0
        %611 = vmatprep.subr.mxu0 0.0
        %612 = vmatpush1.msra.mxu0 0.0
        %613 = vmatprep.subr.mxu0 0.0
        %614 = vmatpush1.msra.mxu0 0.0
        %615 = vmatprep.subr.mxu0 0.0
        %616 = vmatpush1.msra.mxu0 0.0
        %617 = vmatprep.subr.mxu0 0.0
        %618 = vmatpush1.msra.mxu0 0.0
        %619 = vmatprep.subr.mxu0 0.0
        %620 = vmatpush1.msra.mxu0 0.0
        %621 = vmatprep.subr.mxu0 0.0
        %622 = vmatpush1.msra.mxu0 0.0
        %623 = vmatprep.subr.mxu0 0.0
        %624 = vmatpush1.msra.mxu0 0.0
        %625 = vmatprep.subr.mxu0 0.0
        %626 = vmatpush1.msra.mxu0 0.0
        %627 = vmatprep.subr.mxu0 0.0
        %628 = vmatpush1.msra.mxu0 0.0
        %629 = vmatprep.subr.mxu0 0.0
        %630 = vmatpush1.msra.mxu0 0.0
        %631 = vmatprep.subr.mxu0 0.0
        %632 = vmatpush1.msra.mxu0 0.0
        %633 = vmatprep.subr.mxu0 0.0
        %634 = vmatpush1.msra.mxu0 0.0
        %635 = vmatprep.subr.mxu0 0.0
        %636 = vmatpush1.msra.mxu0 0.0
        %637 = vmatprep.subr.mxu0 0.0
        %638 = vmatpush1.msra.mxu0 0.0
        %639 = vmatprep.subr.mxu0 0.0
        %640 = vmatpush1.msra.mxu0 0.0
        %641 = vmatprep.subr.mxu0 0.0
        %642 = vmatpush1.msra.mxu0 0.0
        %643 = vmatprep.subr.mxu0 0.0
        %644 = vmatpush1.msra.mxu0 0.0
        %645 = vmatprep.subr.mxu0 0.0
        %646 = vmatpush1.msra.mxu0 0.0
        %647 = vmatprep.mubr.f32.mxu0 0.0
        %648 = vmatmul.mubr.f32.gmra.mrb[0].mxu0 %v578
        %v649 = vpop.f32.mrb[0].mxu0
        %v650 = vadd.f32 %v569, %v649
        %v651 = vpop.f32.mrb[0].mxu0
        %v652 = vadd.f32 %v569, %v651
        %653 = vmatprep.mubr.f32.mxu0 0.0
        %654 = vmatmul.mubr.f32.gmra.mrb[0].mxu0 %v581
        %v655 = vpop.f32.mrb[0].mxu0
        %v656 = vadd.f32 %v574, %v655
        %v657 = vpop.f32.mrb[0].mxu0
        %v658 = vadd.f32 %v574, %v657
        %659 = vdwg.mxu0
        %660 = vmatprep.subr.mxu0 %v543
        %661 = vmatpush1.msra.mxu0 %v542
        %662 = vmatprep.subr.mxu0 %v547
        %663 = vmatpush1.msra.mxu0 %v546
        %664 = vmatprep.subr.mxu0 %v551
        %665 = vmatpush1.msra.mxu0 %v550
        %666 = vmatprep.subr.mxu0 %v555
        %667 = vmatpush1.msra.mxu0 %v554
        %668 = vmatprep.subr.mxu0 %v559
        %669 = vmatpush1.msra.mxu0 %v558
        %670 = vmatprep.subr.mxu0 %v563
        %671 = vmatpush1.msra.mxu0 %v562
        %672 = vmatprep.subr.mxu0 0.0
        %673 = vmatpush1.msra.mxu0 0.0
        %674 = vmatprep.subr.mxu0 0.0
        %675 = vmatpush1.msra.mxu0 0.0
        %676 = vmatprep.subr.mxu0 0.0
        %677 = vmatpush1.msra.mxu0 0.0
        %678 = vmatprep.subr.mxu0 0.0
        %679 = vmatpush1.msra.mxu0 0.0
        %680 = vmatprep.subr.mxu0 0.0
        %681 = vmatpush1.msra.mxu0 0.0
        %682 = vmatprep.subr.mxu0 0.0
        %683 = vmatpush1.msra.mxu0 0.0
        %684 = vmatprep.subr.mxu0 0.0
        %685 = vmatpush1.msra.mxu0 0.0
        %686 = vmatprep.subr.mxu0 0.0
        %687 = vmatpush1.msra.mxu0 0.0
        %688 = vmatprep.subr.mxu0 0.0
        %689 = vmatpush1.msra.mxu0 0.0
        %690 = vmatprep.subr.mxu0 0.0
        %691 = vmatpush1.msra.mxu0 0.0
        %692 = vmatprep.subr.mxu0 0.0
        %693 = vmatpush1.msra.mxu0 0.0
        %694 = vmatprep.subr.mxu0 0.0
        %695 = vmatpush1.msra.mxu0 0.0
        %696 = vmatprep.subr.mxu0 0.0
        %697 = vmatpush1.msra.mxu0 0.0
        %698 = vmatprep.subr.mxu0 0.0
        %699 = vmatpush1.msra.mxu0 0.0
        %700 = vmatprep.subr.mxu0 0.0
        %701 = vmatpush1.msra.mxu0 0.0
        %702 = vmatprep.subr.mxu0 0.0
        %703 = vmatpush1.msra.mxu0 0.0
        %704 = vmatprep.subr.mxu0 0.0
        %705 = vmatpush1.msra.mxu0 0.0
        %706 = vmatprep.subr.mxu0 0.0
        %707 = vmatpush1.msra.mxu0 0.0
        %708 = vmatprep.subr.mxu0 0.0
        %709 = vmatpush1.msra.mxu0 0.0
        %710 = vmatprep.subr.mxu0 0.0
        %711 = vmatpush1.msra.mxu0 0.0
        %712 = vmatprep.subr.mxu0 0.0
        %713 = vmatpush1.msra.mxu0 0.0
        %714 = vmatprep.subr.mxu0 0.0
        %715 = vmatpush1.msra.mxu0 0.0
        %716 = vmatprep.subr.mxu0 0.0
        %717 = vmatpush1.msra.mxu0 0.0
        %718 = vmatprep.subr.mxu0 0.0
        %719 = vmatpush1.msra.mxu0 0.0
        %720 = vmatprep.subr.mxu0 0.0
        %721 = vmatpush1.msra.mxu0 0.0
        %722 = vmatprep.subr.mxu0 0.0
        %723 = vmatpush1.msra.mxu0 0.0
        %724 = vmatprep.mubr.f32.mxu0 0.0
        %725 = vmatmul.mubr.f32.gmra.mrb[0].mxu0 %v578
        %v726 = vpop.f32.mrb[0].mxu0
        %v727 = vadd.f32 %v569, %v726
        %v728 = vpop.f32.mrb[0].mxu0
        %v729 = vadd.f32 %v569, %v728
        %730 = vmatprep.mubr.f32.mxu0 0.0
        %731 = vmatmul.mubr.f32.gmra.mrb[0].mxu0 %v581
        %v732 = vpop.f32.mrb[0].mxu0
        %v733 = vadd.f32 %v574, %v732
        %v734 = vpop.f32.mrb[0].mxu0
        %v735 = vadd.f32 %v574, %v734
        %736 = vdwg.mxu0
        %vm737 = vcmp.gt.f32.partialorder %v650, 0.0
        %vm738 = vcmp.gt.f32.partialorder %v652, 0.0
        %vm739 = vcmp.gt.f32.partialorder %v727, 0.0
        %vm740 = vcmp.gt.f32.partialorder %v729, 0.0
        %vm741 = vcmp.gt.f32.partialorder %v656, 0.0
        %vm742 = vcmp.gt.f32.partialorder %v658, 0.0
        %vm743 = vcmp.gt.f32.partialorder %v733, 0.0
        %vm744 = vcmp.gt.f32.partialorder %v735, 0.0
        %v745 = vmin.f32 %v650, 0.0
        %v746 = vmin.f32 %v652, 0.0
        %v747 = vmin.f32 %v727, 0.0
        %v748 = vmin.f32 %v729, 0.0
        %v749 = vmin.f32 %v656, 0.0
        %v750 = vmin.f32 %v658, 0.0
        %v751 = vmin.f32 %v733, 0.0
        %v752 = vmin.f32 %v735, 0.0
        %v753 = vmul.f32 %v745, 1.442695
        %v754 = vpow.pop %v753
        %v755 = vmul.f32 %v746, 1.442695
        %v756 = vpow.pop %v755
        %v757 = vmul.f32 %v747, 1.442695
        %v758 = vpow.pop %v757
        %v759 = vmul.f32 %v748, 1.442695
        %v760 = vpow.pop %v759
        %v761 = vmul.f32 %v749, 1.442695
        %v762 = vpow.pop %v761
        %v763 = vmul.f32 %v750, 1.442695
        %v764 = vpow.pop %v763
        %v765 = vmul.f32 %v751, 1.442695
        %v766 = vpow.pop %v765
        %v767 = vmul.f32 %v752, 1.442695
        %v768 = vpow.pop %v767
        %v769 = vsub.f32 %v754, 1.0
        %v770 = vsub.f32 %v756, 1.0
        %v771 = vsub.f32 %v758, 1.0
        %v772 = vsub.f32 %v760, 1.0
        %v773 = vsub.f32 %v762, 1.0
        %v774 = vsub.f32 %v764, 1.0
        %v775 = vsub.f32 %v766, 1.0
        %v776 = vsub.f32 %v768, 1.0
        %v777 = vsel %vm737, %v650, %v769
        %v778 = vsel %vm738, %v652, %v770
        %v779 = vsel %vm739, %v727, %v771
        %v780 = vsel %vm740, %v729, %v772
        %v781 = vsel %vm741, %v656, %v773
        %v782 = vsel %vm742, %v658, %v774
        %v783 = vsel %vm743, %v733, %v775
        %v784 = vsel %vm744, %v735, %v776
        %785 = vst [vmem:[#allocation3] sm:$0xff] %v777
        %786 = vst [vmem:[#allocation3 + $0x8] sm:$0xff] %v778
        %787 = vst [vmem:[#allocation3 + $0x10] sm:$0xff] %v779
        %788 = vst [vmem:[#allocation3 + $0x18] sm:$0xff] %v780
        %789 = vst [vmem:[#allocation3 + $0x20] sm:$0xff] %v781
        %790 = vst [vmem:[#allocation3 + $0x28] sm:$0xff] %v782
        %791 = vst [vmem:[#allocation3 + $0x30] sm:$0xff] %v783
        %792 = vst [vmem:[#allocation3 + $0x38] sm:$0xff] %v784
        %793 = vrot.lane.b32.xlu0 %v777, 127
        %v794 = vpop.permute.xlu0 %793
        %795 = vrot.lane.b32.xlu0 %v781, 127
        %v796 = vpop.permute.xlu0 %795
        %797 = vrot.lane.b32.xlu0 %v778, 127
        %v798 = vpop.permute.xlu0 %797
        %799 = vrot.lane.b32.xlu0 %v782, 127
        %v800 = vpop.permute.xlu0 %799
        %801 = vrot.lane.b32.xlu0 %v779, 127
        %v802 = vpop.permute.xlu0 %801
        %803 = vrot.lane.b32.xlu0 %v783, 127
        %v804 = vpop.permute.xlu0 %803
        %805 = vrot.lane.b32.xlu0 %v780, 127
        %v806 = vpop.permute.xlu0 %805
        %807 = vrot.lane.b32.xlu0 %v784, 127
        %v808 = vpop.permute.xlu0 %807
        %v809 = vsel %vm489, %v802, %v806
        %v810 = vsel %vm489, %v804, %v808
        %v811 = vsel %vm489, %v798, %v802
        %v812 = vsel %vm489, %v800, %v804
        %v813 = vsel %vm489, %v794, %v798
        %v814 = vsel %vm489, %v796, %v800
        %v815 = vsel %vm489, %v806, %v794
        %v816 = vsel %vm489, %v808, %v796
        %v817 = vmul.f32 %v813, %v518
        %v818 = vmul.f32 %v811, %v519
        %v819 = vmul.f32 %v809, %v520
        %v820 = vmul.f32 %v815, %v521
        %v821 = vmul.f32 %v814, %v518
        %v822 = vmul.f32 %v812, %v519
        %v823 = vmul.f32 %v810, %v520
        %v824 = vmul.f32 %v816, %v521
        %825 = vst [vmem:[#allocation3 + $0x40] sm:$0xff] %v817
        %826 = vst [vmem:[#allocation3 + $0x48] sm:$0xff] %v818
        %827 = vst [vmem:[#allocation3 + $0x50] sm:$0xff] %v819
        %828 = vst [vmem:[#allocation3 + $0x58] sm:$0xff] %v820
        %829 = vst [vmem:[#allocation3 + $0x60] sm:$0xff] %v821
        %830 = vst [vmem:[#allocation3 + $0x68] sm:$0xff] %v822
        %831 = vst [vmem:[#allocation3 + $0x70] sm:$0xff] %v823
        %832 = vst [vmem:[#allocation3 + $0x78] sm:$0xff] %v824
        %v833 = vld [vmem:[%s3] sm:$0xff]
        %v834 = vld [vmem:[%s3 + $0x8] sm:$0xff]
        %v835 = vld [vmem:[#allocation3] sm:$0xff]
        %v836 = vld [vmem:[#allocation3 + $0x8] sm:$0xff]
        %v837 = vld [vmem:[#allocation3 + $0x10] sm:$0xff]
        %v838 = vld [vmem:[#allocation3 + $0x18] sm:$0xff]
        %v839 = vld [vmem:[#allocation3 + $0x20] sm:$0xff]
        %v840 = vld [vmem:[#allocation3 + $0x28] sm:$0xff]
        %v841 = vld [vmem:[#allocation3 + $0x30] sm:$0xff]
        %v842 = vld [vmem:[#allocation3 + $0x38] sm:$0xff]
        %v843 = vld [vmem:[#allocation3 + $0x40] sm:$0xff]
        %v844 = vld [vmem:[#allocation3 + $0x48] sm:$0xff]
        %v845 = vld [vmem:[#allocation3 + $0x50] sm:$0xff]
        %v846 = vld [vmem:[#allocation3 + $0x58] sm:$0xff]
        %v847 = vld [vmem:[#allocation3 + $0x60] sm:$0xff]
        %v848 = vld [vmem:[#allocation3 + $0x68] sm:$0xff]
        %v849 = vld [vmem:[#allocation3 + $0x70] sm:$0xff]
        %v850 = vld [vmem:[#allocation3 + $0x78] sm:$0xff]
        %v851 = vld [vmem:[%s4] sm:$0xff]
        %v852 = vld [vmem:[%s4 + $0x8] sm:$0xff]
        %854 = vset.pattern.permute.xlu0 0
        %855 = vperm.xlu0 %854, %v851
        %v856 = vpop.permute.xlu0 %855
        %859 = vset.pattern.permute.xlu0 0
        %860 = vperm.xlu0 %859, %v852
        %v861 = vpop.permute.xlu0 %860
        %vm863 = vcmask 261120
        %v865 = vsel %vm863, %v833, 0
        %v868 = vsel %vm863, %v834, 0
        %870 = vmatprep.subr.mxu0 %v836
        %871 = vmatpush1.msra.mxu0 %v835
        %872 = vmatprep.subr.mxu0 %v840
        %873 = vmatpush1.msra.mxu0 %v839
        %874 = vmatprep.subr.mxu0 %v844
        %875 = vmatpush1.msra.mxu0 %v843
        %876 = vmatprep.subr.mxu0 %v848
        %877 = vmatpush1.msra.mxu0 %v847
        %878 = vmatprep.subr.mxu0 0.0
        %879 = vmatpush1.msra.mxu0 0.0
        %880 = vmatprep.subr.mxu0 0.0
        %881 = vmatpush1.msra.mxu0 0.0
        %882 = vmatprep.subr.mxu0 0.0
        %883 = vmatpush1.msra.mxu0 0.0
        %884 = vmatprep.subr.mxu0 0.0
        %885 = vmatpush1.msra.mxu0 0.0
        %886 = vmatprep.subr.mxu0 0.0
        %887 = vmatpush1.msra.mxu0 0.0
        %888 = vmatprep.subr.mxu0 0.0
        %889 = vmatpush1.msra.mxu0 0.0
        %890 = vmatprep.subr.mxu0 0.0
        %891 = vmatpush1.msra.mxu0 0.0
        %892 = vmatprep.subr.mxu0 0.0
        %893 = vmatpush1.msra.mxu0 0.0
        %894 = vmatprep.subr.mxu0 0.0
        %895 = vmatpush1.msra.mxu0 0.0
        %896 = vmatprep.subr.mxu0 0.0
        %897 = vmatpush1.msra.mxu0 0.0
        %898 = vmatprep.subr.mxu0 0.0
        %899 = vmatpush1.msra.mxu0 0.0
        %900 = vmatprep.subr.mxu0 0.0
        %901 = vmatpush1.msra.mxu0 0.0
        %902 = vmatprep.subr.mxu0 0.0
        %903 = vmatpush1.msra.mxu0 0.0
        %904 = vmatprep.subr.mxu0 0.0
        %905 = vmatpush1.msra.mxu0 0.0
        %906 = vmatprep.subr.mxu0 0.0
        %907 = vmatpush1.msra.mxu0 0.0
        %908 = vmatprep.subr.mxu0 0.0
        %909 = vmatpush1.msra.mxu0 0.0
        %910 = vmatprep.subr.mxu0 0.0
        %911 = vmatpush1.msra.mxu0 0.0
        %912 = vmatprep.subr.mxu0 0.0
        %913 = vmatpush1.msra.mxu0 0.0
        %914 = vmatprep.subr.mxu0 0.0
        %915 = vmatpush1.msra.mxu0 0.0
        %916 = vmatprep.subr.mxu0 0.0
        %917 = vmatpush1.msra.mxu0 0.0
        %918 = vmatprep.subr.mxu0 0.0
        %919 = vmatpush1.msra.mxu0 0.0
        %920 = vmatprep.subr.mxu0 0.0
        %921 = vmatpush1.msra.mxu0 0.0
        %922 = vmatprep.subr.mxu0 0.0
        %923 = vmatpush1.msra.mxu0 0.0
        %924 = vmatprep.subr.mxu0 0.0
        %925 = vmatpush1.msra.mxu0 0.0
        %926 = vmatprep.subr.mxu0 0.0
        %927 = vmatpush1.msra.mxu0 0.0
        %928 = vmatprep.subr.mxu0 0.0
        %929 = vmatpush1.msra.mxu0 0.0
        %930 = vmatprep.subr.mxu0 0.0
        %931 = vmatpush1.msra.mxu0 0.0
        %932 = vmatprep.subr.mxu0 0.0
        %933 = vmatpush1.msra.mxu0 0.0
        %934 = vmatprep.mubr.f32.mxu0 0.0
        %935 = vmatmul.mubr.f32.gmra.mrb[0].mxu0 %v865
        %v936 = vpop.f32.mrb[0].mxu0
        %v937 = vadd.f32 %v856, %v936
        %v938 = vpop.f32.mrb[0].mxu0
        %v939 = vadd.f32 %v856, %v938
        %940 = vmatprep.mubr.f32.mxu0 0.0
        %941 = vmatmul.mubr.f32.gmra.mrb[0].mxu0 %v868
        %v942 = vpop.f32.mrb[0].mxu0
        %v943 = vadd.f32 %v861, %v942
        %v944 = vpop.f32.mrb[0].mxu0
        %v945 = vadd.f32 %v861, %v944
        %946 = vdwg.mxu0
        %947 = vmatprep.subr.mxu0 %v838
        %948 = vmatpush1.msra.mxu0 %v837
        %949 = vmatprep.subr.mxu0 %v842
        %950 = vmatpush1.msra.mxu0 %v841
        %951 = vmatprep.subr.mxu0 %v846
        %952 = vmatpush1.msra.mxu0 %v845
        %953 = vmatprep.subr.mxu0 %v850
        %954 = vmatpush1.msra.mxu0 %v849
        %955 = vmatprep.subr.mxu0 0.0
        %956 = vmatpush1.msra.mxu0 0.0
        %957 = vmatprep.subr.mxu0 0.0
        %958 = vmatpush1.msra.mxu0 0.0
        %959 = vmatprep.subr.mxu0 0.0
        %960 = vmatpush1.msra.mxu0 0.0
        %961 = vmatprep.subr.mxu0 0.0
        %962 = vmatpush1.msra.mxu0 0.0
        %963 = vmatprep.subr.mxu0 0.0
        %964 = vmatpush1.msra.mxu0 0.0
        %965 = vmatprep.subr.mxu0 0.0
        %966 = vmatpush1.msra.mxu0 0.0
        %967 = vmatprep.subr.mxu0 0.0
        %968 = vmatpush1.msra.mxu0 0.0
        %969 = vmatprep.subr.mxu0 0.0
        %970 = vmatpush1.msra.mxu0 0.0
        %971 = vmatprep.subr.mxu0 0.0
        %972 = vmatpush1.msra.mxu0 0.0
        %973 = vmatprep.subr.mxu0 0.0
        %974 = vmatpush1.msra.mxu0 0.0
        %975 = vmatprep.subr.mxu0 0.0
        %976 = vmatpush1.msra.mxu0 0.0
        %977 = vmatprep.subr.mxu0 0.0
        %978 = vmatpush1.msra.mxu0 0.0
        %979 = vmatprep.subr.mxu0 0.0
        %980 = vmatpush1.msra.mxu0 0.0
        %981 = vmatprep.subr.mxu0 0.0
        %982 = vmatpush1.msra.mxu0 0.0
        %983 = vmatprep.subr.mxu0 0.0
        %984 = vmatpush1.msra.mxu0 0.0
        %985 = vmatprep.subr.mxu0 0.0
        %986 = vmatpush1.msra.mxu0 0.0
        %987 = vmatprep.subr.mxu0 0.0
        %988 = vmatpush1.msra.mxu0 0.0
        %989 = vmatprep.subr.mxu0 0.0
        %990 = vmatpush1.msra.mxu0 0.0
        %991 = vmatprep.subr.mxu0 0.0
        %992 = vmatpush1.msra.mxu0 0.0
        %993 = vmatprep.subr.mxu0 0.0
        %994 = vmatpush1.msra.mxu0 0.0
        %995 = vmatprep.subr.mxu0 0.0
        %996 = vmatpush1.msra.mxu0 0.0
        %997 = vmatprep.subr.mxu0 0.0
        %998 = vmatpush1.msra.mxu0 0.0
        %999 = vmatprep.subr.mxu0 0.0
        %1000 = vmatpush1.msra.mxu0 0.0
        %1001 = vmatprep.subr.mxu0 0.0
        %1002 = vmatpush1.msra.mxu0 0.0
        %1003 = vmatprep.subr.mxu0 0.0
        %1004 = vmatpush1.msra.mxu0 0.0
        %1005 = vmatprep.subr.mxu0 0.0
        %1006 = vmatpush1.msra.mxu0 0.0
        %1007 = vmatprep.subr.mxu0 0.0
        %1008 = vmatpush1.msra.mxu0 0.0
        %1009 = vmatprep.subr.mxu0 0.0
        %1010 = vmatpush1.msra.mxu0 0.0
        %1011 = vmatprep.mubr.f32.mxu0 0.0
        %1012 = vmatmul.mubr.f32.gmra.mrb[0].mxu0 %v865
        %v1013 = vpop.f32.mrb[0].mxu0
        %v1014 = vadd.f32 %v856, %v1013
        %v1015 = vpop.f32.mrb[0].mxu0
        %v1016 = vadd.f32 %v856, %v1015
        %1017 = vmatprep.mubr.f32.mxu0 0.0
        %1018 = vmatmul.mubr.f32.gmra.mrb[0].mxu0 %v868
        %v1019 = vpop.f32.mrb[0].mxu0
        %v1020 = vadd.f32 %v861, %v1019
        %v1021 = vpop.f32.mrb[0].mxu0
        %v1022 = vadd.f32 %v861, %v1021
        %1023 = vdwg.mxu0
        %vm1024 = vcmp.gt.f32.partialorder %v937, 0.0
        %vm1025 = vcmp.gt.f32.partialorder %v939, 0.0
        %vm1026 = vcmp.gt.f32.partialorder %v1014, 0.0
        %vm1027 = vcmp.gt.f32.partialorder %v1016, 0.0
        %vm1028 = vcmp.gt.f32.partialorder %v943, 0.0
        %vm1029 = vcmp.gt.f32.partialorder %v945, 0.0
        %vm1030 = vcmp.gt.f32.partialorder %v1020, 0.0
        %vm1031 = vcmp.gt.f32.partialorder %v1022, 0.0
        %v1032 = vmin.f32 %v937, 0.0
        %v1033 = vmin.f32 %v939, 0.0
        %v1034 = vmin.f32 %v1014, 0.0
        %v1035 = vmin.f32 %v1016, 0.0
        %v1036 = vmin.f32 %v943, 0.0
        %v1037 = vmin.f32 %v945, 0.0
        %v1038 = vmin.f32 %v1020, 0.0
        %v1039 = vmin.f32 %v1022, 0.0
        %v1040 = vmul.f32 %v1032, 1.442695
        %v1041 = vpow.pop %v1040
        %v1042 = vmul.f32 %v1033, 1.442695
        %v1043 = vpow.pop %v1042
        %v1044 = vmul.f32 %v1034, 1.442695
        %v1045 = vpow.pop %v1044
        %v1046 = vmul.f32 %v1035, 1.442695
        %v1047 = vpow.pop %v1046
        %v1048 = vmul.f32 %v1036, 1.442695
        %v1049 = vpow.pop %v1048
        %v1050 = vmul.f32 %v1037, 1.442695
        %v1051 = vpow.pop %v1050
        %v1052 = vmul.f32 %v1038, 1.442695
        %v1053 = vpow.pop %v1052
        %v1054 = vmul.f32 %v1039, 1.442695
        %v1055 = vpow.pop %v1054
        %v1056 = vsub.f32 %v1041, 1.0
        %v1057 = vsub.f32 %v1043, 1.0
        %v1058 = vsub.f32 %v1045, 1.0
        %v1059 = vsub.f32 %v1047, 1.0
        %v1060 = vsub.f32 %v1049, 1.0
        %v1061 = vsub.f32 %v1051, 1.0
        %v1062 = vsub.f32 %v1053, 1.0
        %v1063 = vsub.f32 %v1055, 1.0
        %v1064 = vsel %vm1024, %v937, %v1056
        %v1065 = vsel %vm1025, %v939, %v1057
        %v1066 = vsel %vm1026, %v1014, %v1058
        %v1067 = vsel %vm1027, %v1016, %v1059
        %v1068 = vsel %vm1028, %v943, %v1060
        %v1069 = vsel %vm1029, %v945, %v1061
        %v1070 = vsel %vm1030, %v1020, %v1062
        %v1071 = vsel %vm1031, %v1022, %v1063
        %vm1072 = vcmp.eq.s32.totalorder %v388, 0
        %vm1073 = vcmp.eq.s32.totalorder %v389, 0
        %vm1074 = vcmp.eq.s32.totalorder %v390, 0
        %vm1075 = vcmp.eq.s32.totalorder %v391, 0
        %v1076 = vsel %vm1072, 1, 0
        %v1077 = vsel %vm1073, 1, 0
        %v1078 = vsel %vm1074, 1, 0
        %v1079 = vsel %vm1075, 1, 0
        %v1080 = vcvt.s32.f32 %v1076
        %v1081 = vcvt.s32.f32 %v1077
        %v1082 = vcvt.s32.f32 %v1078
        %v1083 = vcvt.s32.f32 %v1079
        %v1084 = vmul.f32 %v1064, %v1080
        %v1085 = vmul.f32 %v1065, %v1081
        %v1086 = vmul.f32 %v1066, %v1082
        %v1087 = vmul.f32 %v1067, %v1083
        %v1088 = vmul.f32 %v1068, %v1080
        %v1089 = vmul.f32 %v1069, %v1081
        %v1090 = vmul.f32 %v1070, %v1082
        %v1091 = vmul.f32 %v1071, %v1083
        %1092 = vst [vmem:[#allocation4] sm:$0xff] %v1084
        %1093 = vst [vmem:[#allocation4 + $0x8] sm:$0xff] %v1085
        %1094 = vst [vmem:[#allocation4 + $0x10] sm:$0xff] %v1086
        %1095 = vst [vmem:[#allocation4 + $0x18] sm:$0xff] %v1087
        %1096 = vst [vmem:[#allocation4 + $0x20] sm:$0xff] %v1088
        %1097 = vst [vmem:[#allocation4 + $0x28] sm:$0xff] %v1089
        %1098 = vst [vmem:[#allocation4 + $0x30] sm:$0xff] %v1090
        %1099 = vst [vmem:[#allocation4 + $0x38] sm:$0xff] %v1091
        %vm1100 = vcmp.eq.s32.totalorder %v388, 8
        %vm1101 = vcmp.eq.s32.totalorder %v389, 8
        %vm1102 = vcmp.eq.s32.totalorder %v390, 8
        %vm1103 = vcmp.eq.s32.totalorder %v391, 8
        %v1104 = vsel %vm1100, 1, 0
        %v1105 = vsel %vm1101, 1, 0
        %v1106 = vsel %vm1102, 1, 0
        %v1107 = vsel %vm1103, 1, 0
        %v1108 = vcvt.s32.f32 %v1104
        %v1109 = vcvt.s32.f32 %v1105
        %v1110 = vcvt.s32.f32 %v1106
        %v1111 = vcvt.s32.f32 %v1107
        %v1112 = vmul.f32 %v1064, %v1108
        %v1113 = vmul.f32 %v1065, %v1109
        %v1114 = vmul.f32 %v1066, %v1110
        %v1115 = vmul.f32 %v1067, %v1111
        %v1116 = vmul.f32 %v1068, %v1108
        %v1117 = vmul.f32 %v1069, %v1109
        %v1118 = vmul.f32 %v1070, %v1110
        %v1119 = vmul.f32 %v1071, %v1111
        %1120 = vst [vmem:[#allocation4 + $0x40] sm:$0xff] %v1112
        %1121 = vst [vmem:[#allocation4 + $0x48] sm:$0xff] %v1113
        %1122 = vst [vmem:[#allocation4 + $0x50] sm:$0xff] %v1114
        %1123 = vst [vmem:[#allocation4 + $0x58] sm:$0xff] %v1115
        %1124 = vst [vmem:[#allocation4 + $0x60] sm:$0xff] %v1116
        %1125 = vst [vmem:[#allocation4 + $0x68] sm:$0xff] %v1117
        %1126 = vst [vmem:[#allocation4 + $0x70] sm:$0xff] %v1118
        %1127 = vst [vmem:[#allocation4 + $0x78] sm:$0xff] %v1119
        %v1128 = vld [vmem:[%s5] sm:$0x7]
        %v1129 = vld [vmem:[#allocation4] sm:$0xff]
        %v1130 = vld [vmem:[#allocation4 + $0x8] sm:$0xff]
        %v1131 = vld [vmem:[#allocation4 + $0x10] sm:$0xff]
        %v1132 = vld [vmem:[#allocation4 + $0x18] sm:$0xff]
        %v1133 = vld [vmem:[#allocation4 + $0x20] sm:$0xff]
        %v1134 = vld [vmem:[#allocation4 + $0x28] sm:$0xff]
        %v1135 = vld [vmem:[#allocation4 + $0x30] sm:$0xff]
        %v1136 = vld [vmem:[#allocation4 + $0x38] sm:$0xff]
        %v1137 = vld [vmem:[#allocation4 + $0x40] sm:$0xff]
        %v1138 = vld [vmem:[#allocation4 + $0x48] sm:$0xff]
        %v1139 = vld [vmem:[#allocation4 + $0x50] sm:$0xff]
        %v1140 = vld [vmem:[#allocation4 + $0x58] sm:$0xff]
        %v1141 = vld [vmem:[#allocation4 + $0x60] sm:$0xff]
        %v1142 = vld [vmem:[#allocation4 + $0x68] sm:$0xff]
        %v1143 = vld [vmem:[#allocation4 + $0x70] sm:$0xff]
        %v1144 = vld [vmem:[#allocation4 + $0x78] sm:$0xff]
        %v1146 = vsel %vm863, %v1128, 0
        %1148 = vmatprep.subr.mxu0 %v1130
        %1149 = vmatpush1.msra.mxu0 %v1129
        %1150 = vmatprep.subr.mxu0 %v1134
        %1151 = vmatpush1.msra.mxu0 %v1133
        %1152 = vmatprep.subr.mxu0 %v1138
        %1153 = vmatpush1.msra.mxu0 %v1137
        %1154 = vmatprep.subr.mxu0 %v1142
        %1155 = vmatpush1.msra.mxu0 %v1141
        %1156 = vmatprep.subr.mxu0 0.0
        %1157 = vmatpush1.msra.mxu0 0.0
        %1158 = vmatprep.subr.mxu0 0.0
        %1159 = vmatpush1.msra.mxu0 0.0
        %1160 = vmatprep.subr.mxu0 0.0
        %1161 = vmatpush1.msra.mxu0 0.0
        %1162 = vmatprep.subr.mxu0 0.0
        %1163 = vmatpush1.msra.mxu0 0.0
        %1164 = vmatprep.subr.mxu0 0.0
        %1165 = vmatpush1.msra.mxu0 0.0
        %1166 = vmatprep.subr.mxu0 0.0
        %1167 = vmatpush1.msra.mxu0 0.0
        %1168 = vmatprep.subr.mxu0 0.0
        %1169 = vmatpush1.msra.mxu0 0.0
        %1170 = vmatprep.subr.mxu0 0.0
        %1171 = vmatpush1.msra.mxu0 0.0
        %1172 = vmatprep.subr.mxu0 0.0
        %1173 = vmatpush1.msra.mxu0 0.0
        %1174 = vmatprep.subr.mxu0 0.0
        %1175 = vmatpush1.msra.mxu0 0.0
        %1176 = vmatprep.subr.mxu0 0.0
        %1177 = vmatpush1.msra.mxu0 0.0
        %1178 = vmatprep.subr.mxu0 0.0
        %1179 = vmatpush1.msra.mxu0 0.0
        %1180 = vmatprep.subr.mxu0 0.0
        %1181 = vmatpush1.msra.mxu0 0.0
        %1182 = vmatprep.subr.mxu0 0.0
        %1183 = vmatpush1.msra.mxu0 0.0
        %1184 = vmatprep.subr.mxu0 0.0
        %1185 = vmatpush1.msra.mxu0 0.0
        %1186 = vmatprep.subr.mxu0 0.0
        %1187 = vmatpush1.msra.mxu0 0.0
        %1188 = vmatprep.subr.mxu0 0.0
        %1189 = vmatpush1.msra.mxu0 0.0
        %1190 = vmatprep.subr.mxu0 0.0
        %1191 = vmatpush1.msra.mxu0 0.0
        %1192 = vmatprep.subr.mxu0 0.0
        %1193 = vmatpush1.msra.mxu0 0.0
        %1194 = vmatprep.subr.mxu0 0.0
        %1195 = vmatpush1.msra.mxu0 0.0
        %1196 = vmatprep.subr.mxu0 0.0
        %1197 = vmatpush1.msra.mxu0 0.0
        %1198 = vmatprep.subr.mxu0 0.0
        %1199 = vmatpush1.msra.mxu0 0.0
        %1200 = vmatprep.subr.mxu0 0.0
        %1201 = vmatpush1.msra.mxu0 0.0
        %1202 = vmatprep.subr.mxu0 0.0
        %1203 = vmatpush1.msra.mxu0 0.0
        %1204 = vmatprep.subr.mxu0 0.0
        %1205 = vmatpush1.msra.mxu0 0.0
        %1206 = vmatprep.subr.mxu0 0.0
        %1207 = vmatpush1.msra.mxu0 0.0
        %1208 = vmatprep.subr.mxu0 0.0
        %1209 = vmatpush1.msra.mxu0 0.0
        %1210 = vmatprep.subr.mxu0 0.0
        %1211 = vmatpush1.msra.mxu0 0.0
        %1212 = vmatprep.mubr.f32.mxu0 0.0
        %1213 = vmatmul.mubr.f32.gmra.mrb[0].mxu0 %v1146
        %v1214 = vpop.f32.mrb[0].mxu0
        %v1215 = vadd.f32 0.0, %v1214
        %v1216 = vpop.f32.mrb[0].mxu0
        %v1217 = vadd.f32 0.0, %v1216
        %1218 = vdwg.mxu0
        %1219 = vmatprep.subr.mxu0 %v1132
        %1220 = vmatpush1.msra.mxu0 %v1131
        %1221 = vmatprep.subr.mxu0 %v1136
        %1222 = vmatpush1.msra.mxu0 %v1135
        %1223 = vmatprep.subr.mxu0 %v1140
        %1224 = vmatpush1.msra.mxu0 %v1139
        %1225 = vmatprep.subr.mxu0 %v1144
        %1226 = vmatpush1.msra.mxu0 %v1143
        %1227 = vmatprep.subr.mxu0 0.0
        %1228 = vmatpush1.msra.mxu0 0.0
        %1229 = vmatprep.subr.mxu0 0.0
        %1230 = vmatpush1.msra.mxu0 0.0
        %1231 = vmatprep.subr.mxu0 0.0
        %1232 = vmatpush1.msra.mxu0 0.0
        %1233 = vmatprep.subr.mxu0 0.0
        %1234 = vmatpush1.msra.mxu0 0.0
        %1235 = vmatprep.subr.mxu0 0.0
        %1236 = vmatpush1.msra.mxu0 0.0
        %1237 = vmatprep.subr.mxu0 0.0
        %1238 = vmatpush1.msra.mxu0 0.0
        %1239 = vmatprep.subr.mxu0 0.0
        %1240 = vmatpush1.msra.mxu0 0.0
        %1241 = vmatprep.subr.mxu0 0.0
        %1242 = vmatpush1.msra.mxu0 0.0
        %1243 = vmatprep.subr.mxu0 0.0
        %1244 = vmatpush1.msra.mxu0 0.0
        %1245 = vmatprep.subr.mxu0 0.0
        %1246 = vmatpush1.msra.mxu0 0.0
        %1247 = vmatprep.subr.mxu0 0.0
        %1248 = vmatpush1.msra.mxu0 0.0
        %1249 = vmatprep.subr.mxu0 0.0
        %1250 = vmatpush1.msra.mxu0 0.0
        %1251 = vmatprep.subr.mxu0 0.0
        %1252 = vmatpush1.msra.mxu0 0.0
        %1253 = vmatprep.subr.mxu0 0.0
        %1254 = vmatpush1.msra.mxu0 0.0
        %1255 = vmatprep.subr.mxu0 0.0
        %1256 = vmatpush1.msra.mxu0 0.0
        %1257 = vmatprep.subr.mxu0 0.0
        %1258 = vmatpush1.msra.mxu0 0.0
        %1259 = vmatprep.subr.mxu0 0.0
        %1260 = vmatpush1.msra.mxu0 0.0
        %1261 = vmatprep.subr.mxu0 0.0
        %1262 = vmatpush1.msra.mxu0 0.0
        %1263 = vmatprep.subr.mxu0 0.0
        %1264 = vmatpush1.msra.mxu0 0.0
        %1265 = vmatprep.subr.mxu0 0.0
        %1266 = vmatpush1.msra.mxu0 0.0
        %1267 = vmatprep.subr.mxu0 0.0
        %1268 = vmatpush1.msra.mxu0 0.0
        %1269 = vmatprep.subr.mxu0 0.0
        %1270 = vmatpush1.msra.mxu0 0.0
        %1271 = vmatprep.subr.mxu0 0.0
        %1272 = vmatpush1.msra.mxu0 0.0
        %1273 = vmatprep.subr.mxu0 0.0
        %1274 = vmatpush1.msra.mxu0 0.0
        %1275 = vmatprep.subr.mxu0 0.0
        %1276 = vmatpush1.msra.mxu0 0.0
        %1277 = vmatprep.subr.mxu0 0.0
        %1278 = vmatpush1.msra.mxu0 0.0
        %1279 = vmatprep.subr.mxu0 0.0
        %1280 = vmatpush1.msra.mxu0 0.0
        %1281 = vmatprep.subr.mxu0 0.0
        %1282 = vmatpush1.msra.mxu0 0.0
        %1283 = vmatprep.mubr.f32.mxu0 0.0
        %1284 = vmatmul.mubr.f32.gmra.mrb[0].mxu0 %v1146
        %v1285 = vpop.f32.mrb[0].mxu0
        %v1286 = vadd.f32 0.0, %v1285
        %v1287 = vpop.f32.mrb[0].mxu0
        %v1288 = vadd.f32 0.0, %v1287
        %1289 = vdwg.mxu0
        %v1290 = vld [vmem:[%s7] sm:$0xff]
        %v1291 = vld [vmem:[%s7 + $0x8] sm:$0xff]
        %v1292 = vld [vmem:[%s7 + $0x10] sm:$0xff]
        %v1293 = vld [vmem:[%s7 + $0x18] sm:$0xff]
        %v1294 = vld [vmem:[%s7 + $0x20] sm:$0xff]
        %v1295 = vld [vmem:[%s7 + $0x28] sm:$0xff]
        %v1296 = vld [vmem:[%s7 + $0x30] sm:$0xff]
        %v1297 = vld [vmem:[%s7 + $0x38] sm:$0xff]
        %v1298 = vld [vmem:[%s7 + $0x40] sm:$0xff]
        %v1299 = vld [vmem:[%s7 + $0x48] sm:$0xff]
        %v1300 = vld [vmem:[%s7 + $0x50] sm:$0xff]
        %v1301 = vld [vmem:[%s7 + $0x58] sm:$0xff]
        %v1302 = vld [vmem:[%s7 + $0x60] sm:$0xff]
        %v1303 = vld [vmem:[%s7 + $0x68] sm:$0xff]
        %v1304 = vld [vmem:[%s7 + $0x70] sm:$0xff]
        %v1305 = vld [vmem:[%s7 + $0x78] sm:$0xff]
        %v1306 = vld [vmem:[%s7 + $0x80] sm:$0xff]
        %v1307 = vld [vmem:[%s7 + $0x88] sm:$0xff]
        %v1308 = vld [vmem:[%s7 + $0x90] sm:$0xff]
        %v1309 = vld [vmem:[%s7 + $0x98] sm:$0xff]
        %v1310 = vld [vmem:[%s7 + $0xa0] sm:$0xff]
        %v1311 = vld [vmem:[%s7 + $0xa8] sm:$0xff]
        %v1312 = vld [vmem:[%s7 + $0xb0] sm:$0xff]
        %v1313 = vld [vmem:[%s7 + $0xb8] sm:$0xff]
        %v1314 = vld [vmem:[%s7 + $0xc0] sm:$0xff]
        %v1315 = vld [vmem:[%s7 + $0xc8] sm:$0xff]
        %v1316 = vld [vmem:[%s7 + $0xd0] sm:$0xff]
        %v1317 = vld [vmem:[%s7 + $0xd8] sm:$0xff]
        %v1318 = vld [vmem:[%s7 + $0xe0] sm:$0xff]
        %v1319 = vld [vmem:[%s7 + $0xe8] sm:$0xff]
        %v1320 = vld [vmem:[%s7 + $0xf0] sm:$0xff]
        %v1321 = vld [vmem:[%s7 + $0xf8] sm:$0xff]
        %v1322 = vld [vmem:[%s7 + $0x100] sm:$0xff]
        %v1323 = vld [vmem:[%s7 + $0x108] sm:$0xff]
        %v1324 = vld [vmem:[%s7 + $0x110] sm:$0xff]
        %v1325 = vld [vmem:[%s7 + $0x118] sm:$0xff]
        %v1326 = vld [vmem:[%s7 + $0x120] sm:$0xff]
        %v1327 = vld [vmem:[%s7 + $0x128] sm:$0xff]
        %v1328 = vld [vmem:[%s7 + $0x130] sm:$0xff]
        %v1329 = vld [vmem:[%s7 + $0x138] sm:$0xff]
        %v1330 = vld [vmem:[%s7 + $0x140] sm:$0xff]
        %v1331 = vld [vmem:[%s7 + $0x148] sm:$0xff]
        %v1332 = vld [vmem:[%s7 + $0x150] sm:$0xff]
        %v1333 = vld [vmem:[%s7 + $0x158] sm:$0xff]
        %v1334 = vld [vmem:[%s7 + $0x160] sm:$0xff]
        %v1335 = vld [vmem:[%s7 + $0x168] sm:$0xff]
        %v1336 = vld [vmem:[%s7 + $0x170] sm:$0xff]
        %v1337 = vld [vmem:[%s7 + $0x178] sm:$0xff]
        %v1338 = vld [vmem:[%s7 + $0x180] sm:$0xff]
        %v1339 = vld [vmem:[%s7 + $0x188] sm:$0xff]
        %v1340 = vld [vmem:[%s7 + $0x190] sm:$0xff]
        %v1341 = vld [vmem:[%s7 + $0x198] sm:$0xff]
        %v1342 = vld [vmem:[%s7 + $0x1a0] sm:$0xff]
        %v1343 = vld [vmem:[%s7 + $0x1a8] sm:$0xff]
        %v1344 = vld [vmem:[%s7 + $0x1b0] sm:$0xff]
        %v1345 = vld [vmem:[%s7 + $0x1b8] sm:$0xff]
        %v1346 = vld [vmem:[%s7 + $0x1c0] sm:$0xff]
        %v1347 = vld [vmem:[%s7 + $0x1c8] sm:$0xff]
        %v1348 = vld [vmem:[%s7 + $0x1d0] sm:$0xff]
        %v1349 = vld [vmem:[%s7 + $0x1d8] sm:$0xff]
        %v1350 = vld [vmem:[%s7 + $0x1e0] sm:$0xff]
        %v1351 = vld [vmem:[%s7 + $0x1e8] sm:$0xff]
        %v1352 = vld [vmem:[%s7 + $0x1f0] sm:$0xff]
        %v1353 = vld [vmem:[%s7 + $0x1f8] sm:$0xff]
        %v1354 = vld [vmem:[%s6] sm:$0x7]
        %1356 = vset.pattern.permute.xlu0 0
        %1357 = vperm.xlu0 %1356, %v1354
        %v1358 = vpop.permute.xlu0 %1357
        %1360 = vmatprep.subr.mxu0 0.0
        %1361 = vmatpush1.msra.mxu0 %v1290
        %1362 = vmatprep.subr.mxu0 0.0
        %1363 = vmatpush1.msra.mxu0 %v1291
        %1364 = vmatprep.subr.mxu0 0.0
        %1365 = vmatpush1.msra.mxu0 %v1292
        %1366 = vmatprep.subr.mxu0 0.0
        %1367 = vmatpush1.msra.mxu0 %v1293
        %1368 = vmatprep.subr.mxu0 0.0
        %1369 = vmatpush1.msra.mxu0 %v1294
        %1370 = vmatprep.subr.mxu0 0.0
        %1371 = vmatpush1.msra.mxu0 %v1295
        %1372 = vmatprep.subr.mxu0 0.0
        %1373 = vmatpush1.msra.mxu0 %v1296
        %1374 = vmatprep.subr.mxu0 0.0
        %1375 = vmatpush1.msra.mxu0 %v1297
        %1376 = vmatprep.subr.mxu0 0.0
        %1377 = vmatpush1.msra.mxu0 %v1298
        %1378 = vmatprep.subr.mxu0 0.0
        %1379 = vmatpush1.msra.mxu0 %v1299
        %1380 = vmatprep.subr.mxu0 0.0
        %1381 = vmatpush1.msra.mxu0 %v1300
        %1382 = vmatprep.subr.mxu0 0.0
        %1383 = vmatpush1.msra.mxu0 %v1301
        %1384 = vmatprep.subr.mxu0 0.0
        %1385 = vmatpush1.msra.mxu0 %v1302
        %1386 = vmatprep.subr.mxu0 0.0
        %1387 = vmatpush1.msra.mxu0 %v1303
        %1388 = vmatprep.subr.mxu0 0.0
        %1389 = vmatpush1.msra.mxu0 %v1304
        %1390 = vmatprep.subr.mxu0 0.0
        %1391 = vmatpush1.msra.mxu0 %v1305
        %1392 = vmatprep.subr.mxu0 0.0
        %1393 = vmatpush1.msra.mxu0 %v1306
        %1394 = vmatprep.subr.mxu0 0.0
        %1395 = vmatpush1.msra.mxu0 %v1307
        %1396 = vmatprep.subr.mxu0 0.0
        %1397 = vmatpush1.msra.mxu0 %v1308
        %1398 = vmatprep.subr.mxu0 0.0
        %1399 = vmatpush1.msra.mxu0 %v1309
        %1400 = vmatprep.subr.mxu0 0.0
        %1401 = vmatpush1.msra.mxu0 %v1310
        %1402 = vmatprep.subr.mxu0 0.0
        %1403 = vmatpush1.msra.mxu0 %v1311
        %1404 = vmatprep.subr.mxu0 0.0
        %1405 = vmatpush1.msra.mxu0 %v1312
        %1406 = vmatprep.subr.mxu0 0.0
        %1407 = vmatpush1.msra.mxu0 %v1313
        %1408 = vmatprep.subr.mxu0 0.0
        %1409 = vmatpush1.msra.mxu0 %v1314
        %1410 = vmatprep.subr.mxu0 0.0
        %1411 = vmatpush1.msra.mxu0 %v1315
        %1412 = vmatprep.subr.mxu0 0.0
        %1413 = vmatpush1.msra.mxu0 %v1316
        %1414 = vmatprep.subr.mxu0 0.0
        %1415 = vmatpush1.msra.mxu0 %v1317
        %1416 = vmatprep.subr.mxu0 0.0
        %1417 = vmatpush1.msra.mxu0 %v1318
        %1418 = vmatprep.subr.mxu0 0.0
        %1419 = vmatpush1.msra.mxu0 %v1319
        %1420 = vmatprep.subr.mxu0 0.0
        %1421 = vmatpush1.msra.mxu0 %v1320
        %1422 = vmatprep.subr.mxu0 0.0
        %1423 = vmatpush1.msra.mxu0 %v1321
        %1424 = vmatprep.mubr.f32.mxu0 %v1217
        %1425 = vmatmul.mubr.f32.gmra.mrb[0].mxu0 %v1215
        %v1426 = vpop.f32.mrb[0].mxu0
        %v1427 = vadd.f32 %v1358, %v1426
        %v1428 = vpop.f32.mrb[0].mxu0
        %1429 = vdwg.mxu0
        %1430 = vmatprep.subr.mxu0 0.0
        %1431 = vmatpush1.msra.mxu0 %v1322
        %1432 = vmatprep.subr.mxu0 0.0
        %1433 = vmatpush1.msra.mxu0 %v1323
        %1434 = vmatprep.subr.mxu0 0.0
        %1435 = vmatpush1.msra.mxu0 %v1324
        %1436 = vmatprep.subr.mxu0 0.0
        %1437 = vmatpush1.msra.mxu0 %v1325
        %1438 = vmatprep.subr.mxu0 0.0
        %1439 = vmatpush1.msra.mxu0 %v1326
        %1440 = vmatprep.subr.mxu0 0.0
        %1441 = vmatpush1.msra.mxu0 %v1327
        %1442 = vmatprep.subr.mxu0 0.0
        %1443 = vmatpush1.msra.mxu0 %v1328
        %1444 = vmatprep.subr.mxu0 0.0
        %1445 = vmatpush1.msra.mxu0 %v1329
        %1446 = vmatprep.subr.mxu0 0.0
        %1447 = vmatpush1.msra.mxu0 %v1330
        %1448 = vmatprep.subr.mxu0 0.0
        %1449 = vmatpush1.msra.mxu0 %v1331
        %1450 = vmatprep.subr.mxu0 0.0
        %1451 = vmatpush1.msra.mxu0 %v1332
        %1452 = vmatprep.subr.mxu0 0.0
        %1453 = vmatpush1.msra.mxu0 %v1333
        %1454 = vmatprep.subr.mxu0 0.0
        %1455 = vmatpush1.msra.mxu0 %v1334
        %1456 = vmatprep.subr.mxu0 0.0
        %1457 = vmatpush1.msra.mxu0 %v1335
        %1458 = vmatprep.subr.mxu0 0.0
        %1459 = vmatpush1.msra.mxu0 %v1336
        %1460 = vmatprep.subr.mxu0 0.0
        %1461 = vmatpush1.msra.mxu0 %v1337
        %1462 = vmatprep.subr.mxu0 0.0
        %1463 = vmatpush1.msra.mxu0 %v1338
        %1464 = vmatprep.subr.mxu0 0.0
        %1465 = vmatpush1.msra.mxu0 %v1339
        %1466 = vmatprep.subr.mxu0 0.0
        %1467 = vmatpush1.msra.mxu0 %v1340
        %1468 = vmatprep.subr.mxu0 0.0
        %1469 = vmatpush1.msra.mxu0 %v1341
        %1470 = vmatprep.subr.mxu0 0.0
        %1471 = vmatpush1.msra.mxu0 %v1342
        %1472 = vmatprep.subr.mxu0 0.0
        %1473 = vmatpush1.msra.mxu0 %v1343
        %1474 = vmatprep.subr.mxu0 0.0
        %1475 = vmatpush1.msra.mxu0 %v1344
        %1476 = vmatprep.subr.mxu0 0.0
        %1477 = vmatpush1.msra.mxu0 %v1345
        %1478 = vmatprep.subr.mxu0 0.0
        %1479 = vmatpush1.msra.mxu0 %v1346
        %1480 = vmatprep.subr.mxu0 0.0
        %1481 = vmatpush1.msra.mxu0 %v1347
        %1482 = vmatprep.subr.mxu0 0.0
        %1483 = vmatpush1.msra.mxu0 %v1348
        %1484 = vmatprep.subr.mxu0 0.0
        %1485 = vmatpush1.msra.mxu0 %v1349
        %1486 = vmatprep.subr.mxu0 0.0
        %1487 = vmatpush1.msra.mxu0 %v1350
        %1488 = vmatprep.subr.mxu0 0.0
        %1489 = vmatpush1.msra.mxu0 %v1351
        %1490 = vmatprep.subr.mxu0 0.0
        %1491 = vmatpush1.msra.mxu0 %v1352
        %1492 = vmatprep.subr.mxu0 0.0
        %1493 = vmatpush1.msra.mxu0 %v1353
        %1494 = vmatprep.mubr.f32.mxu0 %v1288
        %1495 = vmatmul.mubr.f32.gmra.mrb[0].mxu0 %v1286
        %v1496 = vpop.f32.mrb[0].mxu0
        %v1497 = vadd.f32 %v1427, %v1496
        %v1498 = vpop.f32.mrb[0].mxu0
        %1499 = vdwg.mxu0
        %vm1500 = vcmask 256000
        %1501 = vst.msk [vmem:[%s338] sm:$0x7] %vm1500, %v1497
        %p1502 = scmp.lt.s32.totalorder %s19, 1
        %s1503 = scalar_select %p1502, %s19, 1
        %s1504 = smul.addr %s1503, 4
        %s1505 = scalar_lea.vmem %s8, %s1504
        // Predicated region
        $region76: #{eegnet_forward.1} parent=70 // pred_check
          %p1506 = pneg %p210
        $region77: #{eegnet_forward.1} parent=70 // pred_check_branch
          %1508 = sbr.rel (%p1506) target = $region79
        $region78: #{eegnet_forward.1} parent=70 // pred_region
          _
        $region79: #{eegnet_forward.1} parent=70 // pred_fallthru
          _
      $region71: #{eegnet_forward.1} parent=5 // pred_fallthru
        _
      %p1509 = scmp.le.s32.totalorder 2, %s14
      // Predicated region
      $region80: #{eegnet_forward.1} parent=5 // pred_check
        %p1510 = pneg %p1509
      $region81: #{eegnet_forward.1} parent=5 // pred_check_branch
        %1512 = sbr.rel (%p1510) target = $region83
      $region82: #{eegnet_forward.1} parent=5 // pred_region
        %s1513 = ssub.s32 %s14, 2
        // Predicated region
        $region84: #{eegnet_forward.1} parent=82 // pred_check
          %p1514 = pneg %p216
        $region85: #{eegnet_forward.1} parent=82 // pred_check_branch
          %1516 = sbr.rel (%p1514) target = $region87
        $region86: #{eegnet_forward.1} parent=82 // pred_region
          %p1517 = scmp.lt.s32.totalorder %s20, 1
          %s1518 = scalar_select %p1517, %s20, 1
          %s1519 = smul.addr %s1518, 4
          %s1520 = scalar_lea.vmem %s8, %s1519
        $region87: #{eegnet_forward.1} parent=82 // pred_fallthru
          _
      $region83: #{eegnet_forward.1} parent=5 // pred_fallthru
        _
    $region6: #{eegnet_forward.1} parent=1 // loop_footer
      %s18 = sadd.s32 1, %s14
    $region7: #{eegnet_forward.1} parent=1 // loop_footer_branch
      %13 = sbr.rel target = $region3
    $region8: #{eegnet_forward.1} parent=1 // loop_exit
      _

</llo_original>
